<compile_context>
chip_gen: v7x
topology: tpu7x:2x2x1
jax: 0.10.0
libtpu: 0.0.40
codegen_flags: <defaults>
</compile_context>

<pallas_src>
import functools

import jax
import jax.numpy as jnp
import numpy as np
from jax.experimental import pallas as pl
from jax.experimental.pallas import tpu as pltpu


def _chamfer_kernel(p1_ref, p2t_ref, out_ref, rowmin_ref, l2sum_ref, *,
                    n_pts, m_pts, tm):
    # p1_ref:   (1, N, 3)   full points1 of this batch element (resident over m)
    # p2t_ref:  (1, 3, TM)  current M-tile of points2 (coords on sublanes)
    # out_ref:  (1, 2, 128) row 0 = loss1, row 1 = loss2 (broadcast over lanes)
    # rowmin_ref: (N, 1) f32 running min_j dist[i, j]
    # l2sum_ref:  (1, 1) f32 running sum_j min_i dist[i, j]
    m_idx = pl.program_id(1)

    @pl.when(m_idx == 0)
    def _init():
        rowmin_ref[...] = jnp.full(rowmin_ref.shape, jnp.inf, jnp.float32)
        l2sum_ref[...] = jnp.zeros(l2sum_ref.shape, jnp.float32)

    p1 = p1_ref[0].astype(jnp.float32)      # (N, 3)
    p2t = p2t_ref[0].astype(jnp.float32)    # (3, TM)

    # ||a||^2 + ||b||^2 - 2 a.b ; cross term on the MXU, -2 folded into p1.
    n1 = jnp.sum(p1 * p1, axis=1, keepdims=True)        # (N, 1)
    n2 = jnp.sum(p2t * p2t, axis=0, keepdims=True)      # (1, TM)
    cross = jnp.dot(p1 * (-2.0), p2t,
                    preferred_element_type=jnp.float32,
                    precision=jax.lax.Precision.HIGHEST)  # (N, TM)
    dist = jnp.maximum(cross + n1 + n2, 0.0)             # clamp fp cancellation

    colmin = jnp.min(dist, axis=0, keepdims=True)        # (1, TM)
    if m_pts % tm != 0:
        # Last tile contains padded columns: exclude them from both directions.
        col = m_idx * tm + jax.lax.broadcasted_iota(jnp.int32, (1, tm), 1)
        valid = col < m_pts
        dist = jnp.where(valid, dist, jnp.inf)            # keep row mins clean
        colmin = jnp.where(valid, colmin, 0.0)            # keep loss2 sum clean

    rowmin_ref[...] = jnp.minimum(rowmin_ref[...],
                                  jnp.min(dist, axis=1, keepdims=True))
    l2sum_ref[...] = l2sum_ref[...] + jnp.sum(colmin, axis=1, keepdims=True)

    @pl.when(m_idx == pl.num_programs(1) - 1)
    def _finalize():
        loss1 = jnp.sum(rowmin_ref[...]) * (1.0 / n_pts)
        loss2 = jnp.sum(l2sum_ref[...]) * (1.0 / m_pts)
        row = jax.lax.broadcasted_iota(jnp.int32, (2, 128), 0)
        out_ref[0] = jnp.where(row == 0, loss1, loss2).astype(jnp.float32)


def _round_up(x, m):
    return (x + m - 1) // m * m


def _pick_tm(n_pts, m_pts, cap=2048, dist_budget_bytes=8 * 1024 * 1024):
    # TM multiple of 128, capped so the (N, TM) f32 tile stays <= ~8 MiB.
    tm = min(cap, _round_up(m_pts, 128))
    vmem_cap = max(128, (dist_budget_bytes // (4 * max(n_pts, 1))) // 128 * 128)
    return max(128, min(tm, vmem_cap))


@functools.partial(jax.jit, static_argnames=("each_batch",))
def chamfer_distance_loss(points1, points2, w1=1.0, w2=1.0, each_batch=False):
    assert points1.ndim == 3 and points1.shape[-1] == 3
    assert points2.ndim == 3 and points2.shape[-1] == 3
    B, N, _ = points1.shape
    B2, M, _ = points2.shape
    assert B == B2

    tm = _pick_tm(N, M)
    m_pad = _round_up(M, tm)
    num_m = m_pad // tm

    p1 = points1.astype(jnp.float32)                                # (B, N, 3)
    p2t = jnp.transpose(points2, (0, 2, 1)).astype(jnp.float32)     # (B, 3, M)
    if m_pad != M:
        p2t = jnp.pad(p2t, ((0, 0), (0, 0), (0, m_pad - M)))        # (B, 3, Mp)

    kernel = functools.partial(_chamfer_kernel, n_pts=N, m_pts=M, tm=tm)
    out = pl.pallas_call(
        kernel,
        out_shape=jax.ShapeDtypeStruct((B, 2, 128), jnp.float32),
        grid_spec=pltpu.PrefetchScalarGridSpec(
            num_scalar_prefetch=0,
            grid=(B, num_m),
            in_specs=[
                # points1 block is independent of m -> stays resident in VMEM.
                pl.BlockSpec((1, N, 3), lambda b, m: (b, 0, 0)),
                pl.BlockSpec((1, 3, tm), lambda b, m: (b, 0, m)),
            ],
            out_specs=pl.BlockSpec((1, 2, 128), lambda b, m: (b, 0, 0)),
            scratch_shapes=[
                pltpu.VMEM((N, 1), jnp.float32),   # running row-min (dmin1)
                pltpu.VMEM((1, 1), jnp.float32),   # running sum of column mins
            ],
        ),
        compiler_params=pltpu.CompilerParams(
            dimension_semantics=("parallel", "arbitrary")),
    )(p1, p2t)

    loss1 = out[:, 0, 0]   # (B,)
    loss2 = out[:, 1, 0]   # (B,)
    loss = w1 * loss1 + w2 * loss2
    if not each_batch:
        loss = jnp.mean(loss)
    return loss


def _reference(points1, points2, w1=1.0, w2=1.0, each_batch=False):
    diff = points1[:, :, None, :] - points2[:, None, :, :]
    dist = jnp.sum(diff * diff, axis=3)
    loss1 = jnp.min(dist, axis=2).mean(axis=1)
    loss2 = jnp.min(jnp.transpose(dist, (0, 2, 1)), axis=2).mean(axis=1)
    loss = w1 * loss1 + w2 * loss2
    return loss if each_batch else jnp.mean(loss)


if __name__ == "__main__":
    key = jax.random.PRNGKey(0)
    k1, k2, k3, k4 = jax.random.split(key, 4)

    # Primary small test.
    B, N, M = 2, 128, 256
    points1 = jax.random.normal(k1, (B, N, 3), dtype=jnp.float32)
    points2 = jax.random.normal(k2, (B, M, 3), dtype=jnp.float32)

    out = jax.block_until_ready(chamfer_distance_loss(points1, points2, 1.0, 1.0))
    ref = jax.block_until_ready(_reference(points1, points2, 1.0, 1.0))
    np.testing.assert_allclose(np.asarray(out), np.asarray(ref),
                               rtol=5e-4, atol=5e-5)

    # Per-batch variant with non-trivial weights.
    out_b = jax.block_until_ready(
        chamfer_distance_loss(points1, points2, 0.7, 1.3, each_batch=True))
    ref_b = jax.block_until_ready(
        _reference(points1, points2, 0.7, 1.3, each_batch=True))
    np.testing.assert_allclose(np.asarray(out_b), np.asarray(ref_b),
                               rtol=5e-4, atol=5e-5)

    # Ragged shapes exercise the M-padding / lane-mask path.
    Br, Nr, Mr = 2, 96, 200
    p1r = jax.random.normal(k3, (Br, Nr, 3), dtype=jnp.float32)
    p2r = jax.random.normal(k4, (Br, Mr, 3), dtype=jnp.float32)
    out_r = jax.block_until_ready(chamfer_distance_loss(p1r, p2r))
    ref_r = jax.block_until_ready(_reference(p1r, p2r))
    np.testing.assert_allclose(np.asarray(out_r), np.asarray(ref_r),
                               rtol=5e-4, atol=5e-5)

    print("KERNEL_OK")
</pallas_src>

<mosaic_0001>
module attributes {stable_mosaic.version = 11 : i64} {
  func.func @_chamfer_kernel(%arg0: i32, %arg1: i32, %arg2: memref<1x128x3xf32, #tpu.memory_space<vmem>>, %arg3: memref<1x3x256xf32, #tpu.memory_space<vmem>>, %arg4: memref<1x2x128xf32, #tpu.memory_space<vmem>>, %arg5: memref<128x1xf32, #tpu.memory_space<vmem>>, %arg6: memref<1x1xf32, #tpu.memory_space<vmem>>) attributes {dimension_semantics = [#tpu.dimension_semantics<parallel>, #tpu.dimension_semantics<arbitrary>], iteration_bounds = array<i64: 2, 1>, scalar_prefetch = 0 : i64, scratch_operands = 2 : i64, tpu.core_type = #tpu.core_type<tc>, window_params = [{transform_indices = @transform_0, window_bounds = array<i64: 1, 128, 3>}, {transform_indices = @transform_1, window_bounds = array<i64: 1, 3, 256>}, {transform_indices = @transform_2, window_bounds = array<i64: 1, 2, 128>}]} {
    %c0_i32 = arith.constant 0 : i32
    %0 = arith.cmpi eq, %arg1, %c0_i32 : i32
    %1 = arith.extui %0 : i1 to i32
    %c0_i32_0 = arith.constant 0 : i32
    %2 = arith.cmpi ne, %1, %c0_i32_0 : i32
    scf.if %2 {
      %cst_23 = arith.constant 0x7F800000 : f32
      %37 = vector.broadcast %cst_23 : f32 to vector<128x1xf32>
      %c0_24 = arith.constant 0 : index
      %c0_25 = arith.constant 0 : index
      %38 = vector.load %arg5[%c0_24, %c0_25] : memref<128x1xf32, #tpu.memory_space<vmem>>, vector<128x1xf32>
      tpu.vector_store %arg5[%c0_24, %c0_25], %37 {strides = array<i32>} : memref<128x1xf32, #tpu.memory_space<vmem>>, vector<128x1xf32>,
      %cst_26 = arith.constant 0.000000e+00 : f32
      %39 = vector.broadcast %cst_26 : f32 to vector<1x1xf32>
      %c0_27 = arith.constant 0 : index
      %c0_28 = arith.constant 0 : index
      %40 = vector.load %arg6[%c0_27, %c0_28] : memref<1x1xf32, #tpu.memory_space<vmem>>, vector<1x1xf32>
      tpu.vector_store %arg6[%c0_27, %c0_28], %39 {strides = array<i32>} : memref<1x1xf32, #tpu.memory_space<vmem>>, vector<1x1xf32>,
    } else {
    }
    %c0 = arith.constant 0 : index
    %c0_1 = arith.constant 0 : index
    %c0_2 = arith.constant 0 : index
    %3 = vector.load %arg2[%c0, %c0_1, %c0_2] : memref<1x128x3xf32, #tpu.memory_space<vmem>>, vector<1x128x3xf32>
    %4 = vector.shape_cast %3 : vector<1x128x3xf32> to vector<128x3xf32>
    %c0_3 = arith.constant 0 : index
    %c0_4 = arith.constant 0 : index
    %c0_5 = arith.constant 0 : index
    %5 = vector.load %arg3[%c0_3, %c0_4, %c0_5] : memref<1x3x256xf32, #tpu.memory_space<vmem>>, vector<1x3x256xf32>
    %6 = vector.shape_cast %5 : vector<1x3x256xf32> to vector<3x256xf32>
    %7 = arith.mulf %4, %4 : vector<128x3xf32>
    %cst = arith.constant dense<0.000000e+00> : vector<128xf32>
    %8 = vector.multi_reduction <add>, %7, %cst [1] : vector<128x3xf32> to vector<128xf32>
    %9 = vector.shape_cast %8 : vector<128xf32> to vector<128x1xf32>
    %10 = arith.mulf %6, %6 : vector<3x256xf32>
    %cst_6 = arith.constant dense<0.000000e+00> : vector<256xf32>
    %11 = vector.multi_reduction <add>, %10, %cst_6 [0] : vector<3x256xf32> to vector<256xf32>
    %12 = vector.shape_cast %11 : vector<256xf32> to vector<1x256xf32>
    %cst_7 = arith.constant -2.000000e+00 : f32
    %13 = vector.broadcast %cst_7 : f32 to vector<128x3xf32>
    %14 = arith.mulf %4, %13 : vector<128x3xf32>
    %cst_8 = arith.constant dense<0.000000e+00> : vector<128x256xf32>
    %15 = tpu.matmul %14, %6, %cst_8 {dimension_numbers = #tpu.dot_dimension_numbers<[1], [0], [0], [1], [0, 0, 1, 1], [], []>, precision = #tpu.contract_precision<fp32>} : vector<128x3xf32>, vector<3x256xf32>, vector<128x256xf32> -> vector<128x256xf32>
    %16 = vector.broadcast %9 : vector<128x1xf32> to vector<128x256xf32>
    %17 = arith.addf %15, %16 : vector<128x256xf32>
    %18 = vector.broadcast %12 : vector<1x256xf32> to vector<128x256xf32>
    %19 = arith.addf %17, %18 : vector<128x256xf32>
    %cst_9 = arith.constant 0.000000e+00 : f32
    %20 = vector.broadcast %cst_9 : f32 to vector<128x256xf32>
    %21 = arith.maximumf %19, %20 : vector<128x256xf32>
    %cst_10 = arith.constant dense<0x7F800000> : vector<256xf32>
    %22 = vector.multi_reduction <minimumf>, %21, %cst_10 [0] : vector<128x256xf32> to vector<256xf32>
    %23 = vector.shape_cast %22 : vector<256xf32> to vector<1x256xf32>
    %c0_11 = arith.constant 0 : index
    %c0_12 = arith.constant 0 : index
    %24 = vector.load %arg5[%c0_11, %c0_12] : memref<128x1xf32, #tpu.memory_space<vmem>>, vector<128x1xf32>
    %cst_13 = arith.constant dense<0x7F800000> : vector<128xf32>
    %25 = vector.multi_reduction <minimumf>, %21, %cst_13 [1] : vector<128x256xf32> to vector<128xf32>
    %26 = vector.shape_cast %25 : vector<128xf32> to vector<128x1xf32>
    %27 = arith.minimumf %24, %26 : vector<128x1xf32>
    %c0_14 = arith.constant 0 : index
    %c0_15 = arith.constant 0 : index
    %28 = vector.load %arg5[%c0_14, %c0_15] : memref<128x1xf32, #tpu.memory_space<vmem>>, vector<128x1xf32>
    tpu.vector_store %arg5[%c0_14, %c0_15], %27 {strides = array<i32>} : memref<128x1xf32, #tpu.memory_space<vmem>>, vector<128x1xf32>,
    %c0_16 = arith.constant 0 : index
    %c0_17 = arith.constant 0 : index
    %29 = vector.load %arg6[%c0_16, %c0_17] : memref<1x1xf32, #tpu.memory_space<vmem>>, vector<1x1xf32>
    %cst_18 = arith.constant dense<0.000000e+00> : vector<1xf32>
    %30 = vector.multi_reduction <add>, %23, %cst_18 [1] : vector<1x256xf32> to vector<1xf32>
    %31 = vector.shape_cast %30 : vector<1xf32> to vector<1x1xf32>
    %32 = arith.addf %29, %31 : vector<1x1xf32>
    %c0_19 = arith.constant 0 : index
    %c0_20 = arith.constant 0 : index
    %33 = vector.load %arg6[%c0_19, %c0_20] : memref<1x1xf32, #tpu.memory_space<vmem>>, vector<1x1xf32>
    tpu.vector_store %arg6[%c0_19, %c0_20], %32 {strides = array<i32>} : memref<1x1xf32, #tpu.memory_space<vmem>>, vector<1x1xf32>,
    %c0_i32_21 = arith.constant 0 : i32
    %34 = arith.cmpi eq, %arg1, %c0_i32_21 : i32
    %35 = arith.extui %34 : i1 to i32
    %c0_i32_22 = arith.constant 0 : i32
    %36 = arith.cmpi ne, %35, %c0_i32_22 : i32
    scf.if %36 {
      %c0_23 = arith.constant 0 : index
      %c0_24 = arith.constant 0 : index
      %37 = vector.load %arg5[%c0_23, %c0_24] : memref<128x1xf32, #tpu.memory_space<vmem>>, vector<128x1xf32>
      %38 = vector.shape_cast %37 : vector<128x1xf32> to vector<1x128x1xf32>
      %cst_25 = arith.constant dense<0.000000e+00> : vector<1xf32>
      %39 = vector.multi_reduction <add>, %38, %cst_25 [1, 2] : vector<1x128x1xf32> to vector<1xf32>
      %40 = vector.shape_cast %39 : vector<1xf32> to vector<1x1x1xf32>
      %41 = vector.extract %40[0, 0, 0] : f32 from vector<1x1x1xf32>
      %cst_26 = arith.constant 7.812500e-03 : f32
      %42 = arith.mulf %41, %cst_26 : f32
      %c0_27 = arith.constant 0 : index
      %c0_28 = arith.constant 0 : index
      %43 = vector.load %arg6[%c0_27, %c0_28] : memref<1x1xf32, #tpu.memory_space<vmem>>, vector<1x1xf32>
      %44 = vector.shape_cast %43 : vector<1x1xf32> to vector<1x1x1xf32>
      %cst_29 = arith.constant dense<0.000000e+00> : vector<1xf32>
      %45 = vector.multi_reduction <add>, %44, %cst_29 [1, 2] : vector<1x1x1xf32> to vector<1xf32>
      %46 = vector.shape_cast %45 : vector<1xf32> to vector<1x1x1xf32>
      %47 = vector.extract %46[0, 0, 0] : f32 from vector<1x1x1xf32>
      %cst_30 = arith.constant 3.906250e-03 : f32
      %48 = arith.mulf %47, %cst_30 : f32
      %49 = tpu.iota {dimensions = array<i32: 0>} : vector<2x128xi32>
      %c0_i32_31 = arith.constant 0 : i32
      %50 = vector.broadcast %c0_i32_31 : i32 to vector<2x128xi32>
      %51 = arith.cmpi eq, %49, %50 : vector<2x128xi32>
      %52 = vector.broadcast %42 : f32 to vector<2x128xf32>
      %53 = vector.broadcast %48 : f32 to vector<2x128xf32>
      %54 = arith.select %51, %52, %53 : vector<2x128xi1>, vector<2x128xf32>
      %c0_32 = arith.constant 0 : index
      %c0_33 = arith.constant 0 : index
      %c0_34 = arith.constant 0 : index
      %55 = vector.load %arg4[%c0_32, %c0_33, %c0_34] : memref<1x2x128xf32, #tpu.memory_space<vmem>>, vector<1x2x128xf32>
      %56 = vector.shape_cast %55 : vector<1x2x128xf32> to vector<2x128xf32>
      %57 = vector.shape_cast %54 : vector<2x128xf32> to vector<1x2x128xf32>
      tpu.vector_store %arg4[%c0_32, %c0_33, %c0_34], %57 {strides = array<i32>} : memref<1x2x128xf32, #tpu.memory_space<vmem>>, vector<1x2x128xf32>,
    } else {
    }
    return
  }
  func.func @transform_0(%arg0: i32, %arg1: i32) -> (i32, i32, i32) {
    %c0_i32 = arith.constant 0 : i32
    %c0_i32_0 = arith.constant 0 : i32
    %c0_i32_1 = arith.constant 0 : i32
    return %arg0, %c0_i32, %c0_i32_0 : i32, i32, i32
  }
  func.func @transform_1(%arg0: i32, %arg1: i32) -> (i32, i32, i32) {
    %c0_i32 = arith.constant 0 : i32
    %c0_i32_0 = arith.constant 0 : i32
    return %arg0, %c0_i32, %arg1 : i32, i32, i32
  }
  func.func @transform_2(%arg0: i32, %arg1: i32) -> (i32, i32, i32) {
    %c0_i32 = arith.constant 0 : i32
    %c0_i32_0 = arith.constant 0 : i32
    %c0_i32_1 = arith.constant 0 : i32
    return %arg0, %c0_i32, %c0_i32_0 : i32, i32, i32
  }
}

</mosaic_0001>

<llo_original>
// kernel: chamfer_distance_loss.1
$region0: #{chamfer_distance_loss.1}
  #allocation0 [shape = 'u32[]', space=smem, size = 0x4, offset = 0x4, fixed_abs, tag = 'smem constant byte address 0x4 - core index']
  #allocation1 [shape = 'u32[144,128]{1,0:T(1,128)}', space=vmem, size = 0x12000, scoped, tag = 'internal scratch']
  #allocation2 [shape = 'f32[128,1]{1,0:T(8,128)}', space=vmem, size = 0x10000, scoped, tag = 'scratch operand']
  #allocation3 [shape = 'f32[1,1]{1,0:T(1,128)}', space=vmem, size = 0x200, scoped, tag = 'scratch operand']
  %s0 = inlined_call_operand.vmem [shape: f32[2,128,3], index: 0, kind: input, shape index: {}]
  %s1 = inlined_call_operand.vmem [shape: f32[2,3,256], index: 1, kind: input, shape index: {}]
  %s2 = inlined_call_operand.vmem [shape: f32[2,2,128], index: 2, kind: output, shape index: {}]
  %s3 = sld [smem:[#allocation0]]
  $region49: #{chamfer_distance_loss.1} parent=0
    _
  %s5 = ssub.s32 1, %s3
  %s6 = scalar_select 0, %s5, %s3
  loop: start=0, step=1, limit=4
  $region2: #{chamfer_distance_loss.1} parent=0 // loop_pre_header
    _
  $region3: #{chamfer_distance_loss.1} parent=0 // loop_header
    %s8 = sphi 0, %s12
    %p9 = scmp.ge.s32.totalorder %s8, 4
    %s15 = sphi 0, %s27
    %s16 = sphi 0, %s23
    %s17 = sphi 0, %s15
    %s18 = sphi 0, %s16
    %s19 = sphi 0, %s17
    %s20 = sphi 0, %s18
    %s30 = sphi 0, %s32
    %s33 = sphi 0, %s30
    %s34 = sphi 0, %s33
    %s50 = sphi 0, %s34
    %s58 = sphi 0, %s60
    %s61 = sphi 0, %s58
    %s62 = sphi 0, %s61
    %s78 = sphi 0, %s62
    %s84 = sphi 0, %s86
    %s87 = sphi 0, %s84
    %s88 = sphi 0, %s87
    %s104 = sphi 0, %s88
  $region4: #{chamfer_distance_loss.1} parent=0 // loop_header_branch
    %11 = sbr.rel (%p9) target = $region8
  $region5: #{chamfer_distance_loss.1} parent=0 // loop_body
    %s13 = ssub.s32 %s8, 1
    %s14 = ssub.s32 %s8, 2
    %s21 = sadd.s32 1, %s16
    %p22 = scmp.ge.s32.totalorder %s21, 1
    %s23 = scalar_select %p22, 0, %s21
    %s24 = sadd.s32 1, %s15
    %s25 = scalar_select %p22, %s24, %s15
    %p26 = scmp.ge.s32.totalorder %s25, 2
    %s27 = scalar_select %p26, 0, %s25
    %s28 = ssub.s32 %s15, %s27
    %p29 = scmp.eq.s32.totalorder %s28, 0
    %s31 = sadd.s32 %s30, 1
    %s32 = scalar_select %p29, %s30, %s31
    %p35 = pneg %p29
    %p36 = scmp.eq.s32.totalorder %s8, 1
    %p37 = por %p35, %p36
    %p38 = scmp.ne.s32.totalorder %s30, %s33
    %p39 = scmp.eq.s32.totalorder %s8, 0
    %p40 = por %p38, %p39
    %p41 = scmp.ne.s32.totalorder %s30, %s33
    %p42 = scmp.eq.s32.totalorder %s13, 1
    %p43 = por %p41, %p42
    %p44 = scmp.ne.s32.totalorder %s33, %s34
    %p45 = scmp.eq.s32.totalorder %s13, 0
    %p46 = por %p44, %p45
    %p47 = scmp.ne.s32.totalorder %s33, %s34
    %p48 = scmp.eq.s32.totalorder %s14, 1
    %p49 = por %p47, %p48
    %p51 = scmp.ne.s32.totalorder %s34, %s50
    %p52 = scmp.eq.s32.totalorder %s14, 0
    %p53 = por %p51, %p52
    %s54 = ssub.s32 %s15, %s27
    %s55 = ssub.s32 %s16, %s23
    %s56 = sor.u32 %s54, %s55
    %p57 = scmp.eq.s32.totalorder %s56, 0
    %s59 = sadd.s32 %s58, 1
    %s60 = scalar_select %p57, %s58, %s59
    %p63 = pneg %p57
    %p64 = scmp.eq.s32.totalorder %s8, 1
    %p65 = por %p63, %p64
    %p66 = scmp.ne.s32.totalorder %s58, %s61
    %p67 = scmp.eq.s32.totalorder %s8, 0
    %p68 = por %p66, %p67
    %p69 = scmp.ne.s32.totalorder %s58, %s61
    %p70 = scmp.eq.s32.totalorder %s13, 1
    %p71 = por %p69, %p70
    %p72 = scmp.ne.s32.totalorder %s61, %s62
    %p73 = scmp.eq.s32.totalorder %s13, 0
    %p74 = por %p72, %p73
    %p75 = scmp.ne.s32.totalorder %s61, %s62
    %p76 = scmp.eq.s32.totalorder %s14, 1
    %p77 = por %p75, %p76
    %p79 = scmp.ne.s32.totalorder %s62, %s78
    %p80 = scmp.eq.s32.totalorder %s14, 0
    %p81 = por %p79, %p80
    %s82 = ssub.s32 %s15, %s27
    %p83 = scmp.eq.s32.totalorder %s82, 0
    %s85 = sadd.s32 %s84, 1
    %s86 = scalar_select %p83, %s84, %s85
    %p89 = pneg %p83
    %p90 = scmp.eq.s32.totalorder %s8, 1
    %p91 = por %p89, %p90
    %p92 = scmp.ne.s32.totalorder %s84, %s87
    %p93 = scmp.eq.s32.totalorder %s8, 0
    %p94 = por %p92, %p93
    %p95 = scmp.ne.s32.totalorder %s84, %s87
    %p96 = scmp.eq.s32.totalorder %s13, 1
    %p97 = por %p95, %p96
    %p98 = scmp.ne.s32.totalorder %s87, %s88
    %p99 = scmp.eq.s32.totalorder %s13, 0
    %p100 = por %p98, %p99
    %p101 = scmp.ne.s32.totalorder %s87, %s88
    %p102 = scmp.eq.s32.totalorder %s14, 1
    %p103 = por %p101, %p102
    %p105 = scmp.ne.s32.totalorder %s88, %s104
    %p106 = scmp.eq.s32.totalorder %s14, 0
    %p107 = por %p105, %p106
    %p108 = scmp.le.s32.totalorder 1, %s8
    %p109 = scmp.lt.s32.totalorder %s8, 3
    %p110 = pnand %p108, %p109
    %p111 = pneg %p110
    // Predicated region
    $region9: #{chamfer_distance_loss.1} parent=5 // pred_check
      _
    $region10: #{chamfer_distance_loss.1} parent=5 // pred_check_branch
      %113 = sbr.rel (%p110) target = $region12
    $region11: #{chamfer_distance_loss.1} parent=5 // pred_region
      %s114 = ssub.s32 %s8, 1
    $region12: #{chamfer_distance_loss.1} parent=5 // pred_fallthru
      _
    %p115 = scmp.lt.s32.totalorder %s8, 2
    // Predicated region
    $region13: #{chamfer_distance_loss.1} parent=5 // pred_check
      %p116 = pneg %p115
    $region14: #{chamfer_distance_loss.1} parent=5 // pred_check_branch
      %118 = sbr.rel (%p116) target = $region16
    $region15: #{chamfer_distance_loss.1} parent=5 // pred_region
      // Predicated region
      $region17: #{chamfer_distance_loss.1} parent=15 // pred_check
        %p119 = pneg %p40
      $region18: #{chamfer_distance_loss.1} parent=15 // pred_check_branch
        %121 = sbr.rel (%p119) target = $region20
      $region19: #{chamfer_distance_loss.1} parent=15 // pred_region
        %p122 = scmp.lt.s32.totalorder %s15, 1
        %s123 = scalar_select %p122, %s15, 1
        %s124 = smul.addr %s123, 16
        %s125 = smul.addr %s124, 8
        %s126 = scalar_lea.vmem %s0, %s125
      $region20: #{chamfer_distance_loss.1} parent=15 // pred_fallthru
        _
      // Predicated region
      $region21: #{chamfer_distance_loss.1} parent=15 // pred_check
        %p127 = pneg %p68
      $region22: #{chamfer_distance_loss.1} parent=15 // pred_check_branch
        %129 = sbr.rel (%p127) target = $region24
      $region23: #{chamfer_distance_loss.1} parent=15 // pred_region
        %s130 = smul.u32 2, %s16
        %p131 = scmp.lt.s32.totalorder %s15, 1
        %s132 = scalar_select %p131, %s15, 1
        %p133 = scmp.lt.s32.totalorder %s130, 1
        %s134 = scalar_select %p133, %s130, 1
        %s135 = smul.addr %s132, 2
        %s136 = sadd.s32 %s134, %s135
        %s137 = smul.addr %s136, 4
        %s138 = scalar_lea.vmem %s1, %s137
        %s139 = smul.u32 2, %s16
      $region24: #{chamfer_distance_loss.1} parent=15 // pred_fallthru
        _
    $region16: #{chamfer_distance_loss.1} parent=5 // pred_fallthru
      _
    %p140 = scmp.le.s32.totalorder 1, %s8
    %p141 = scmp.lt.s32.totalorder %s8, 3
    %p142 = pnand %p140, %p141
    %p143 = pneg %p142
    // Predicated region
    $region25: #{chamfer_distance_loss.1} parent=5 // pred_check
      _
    $region26: #{chamfer_distance_loss.1} parent=5 // pred_check_branch
      %145 = sbr.rel (%p142) target = $region28
    $region27: #{chamfer_distance_loss.1} parent=5 // pred_region
      %s146 = ssub.s32 %s8, 1
      %p147 = scmp.lt.s32.totalorder %s17, 1
      %s148 = scalar_select %p147, %s17, 1
      %s149 = smul.addr %s148, 16
      %s150 = smul.addr %s149, 8
      %s151 = scalar_lea.vmem %s0, %s150
      %p152 = pneg %p46
      %p153 = pneg %p43
      %s154 = smul.u32 2, %s18
      %p155 = scmp.lt.s32.totalorder %s17, 1
      %s156 = scalar_select %p155, %s17, 1
      %p157 = scmp.lt.s32.totalorder %s154, 1
      %s158 = scalar_select %p157, %s154, 1
      %s159 = smul.addr %s156, 2
      %s160 = sadd.s32 %s158, %s159
      %s161 = smul.addr %s160, 4
      %s162 = scalar_lea.vmem %s1, %s161
      %p163 = pneg %p74
      %p164 = pneg %p71
      %p165 = pneg %p100
      %p166 = pneg %p97
      %p167 = scmp.lt.s32.totalorder %s17, 1
      %s168 = scalar_select %p167, %s17, 1
      %s169 = smul.addr %s168, 2
      %s170 = scalar_lea.vmem %s2, %s169
      %p171 = scmp.lt.s32.totalorder %s17, 1
      %s172 = scalar_select %p171, %s17, 1
      %s173 = smul.addr %s172, 16
      %s174 = smul.addr %s173, 8
      %s175 = scalar_lea.vmem %s0, %s174
      %s176 = smul.u32 2, %s18
      %p177 = scmp.lt.s32.totalorder %s17, 1
      %s178 = scalar_select %p177, %s17, 1
      %p179 = scmp.lt.s32.totalorder %s176, 1
      %s180 = scalar_select %p179, %s176, 1
      %s181 = smul.addr %s178, 2
      %s182 = sadd.s32 %s180, %s181
      %s183 = smul.addr %s182, 4
      %s184 = scalar_lea.vmem %s1, %s183
      %s185 = smul.u32 2, %s18
      %p186 = scmp.lt.s32.totalorder %s17, 1
      %s187 = scalar_select %p186, %s17, 1
      %s188 = smul.addr %s187, 2
      %s189 = scalar_lea.vmem %s2, %s188
      %p190 = scmp.eq.s32.totalorder %s18, 0
      // Predicated region
      $region29: #{chamfer_distance_loss.1} parent=27 // pred_check
        %p191 = pneg %p190
      $region30: #{chamfer_distance_loss.1} parent=27 // pred_check_branch
        %193 = sbr.rel (%p191) target = $region32
      $region31: #{chamfer_distance_loss.1} parent=27 // pred_region
        %vm194 = vcmask 7168
        %195 = vst.msk [vmem:[#allocation2] sm:$0xff] %vm194, inf
        %196 = vst.msk [vmem:[#allocation2 + $0x8] sm:$0xff] %vm194, inf
        %197 = vst.msk [vmem:[#allocation2 + $0x10] sm:$0xff] %vm194, inf
        %198 = vst.msk [vmem:[#allocation2 + $0x18] sm:$0xff] %vm194, inf
        %199 = vst.msk [vmem:[#allocation2 + $0x20] sm:$0xff] %vm194, inf
        %200 = vst.msk [vmem:[#allocation2 + $0x28] sm:$0xff] %vm194, inf
        %201 = vst.msk [vmem:[#allocation2 + $0x30] sm:$0xff] %vm194, inf
        %202 = vst.msk [vmem:[#allocation2 + $0x38] sm:$0xff] %vm194, inf
        %203 = vst.msk [vmem:[#allocation2 + $0x40] sm:$0xff] %vm194, inf
        %204 = vst.msk [vmem:[#allocation2 + $0x48] sm:$0xff] %vm194, inf
        %205 = vst.msk [vmem:[#allocation2 + $0x50] sm:$0xff] %vm194, inf
        %206 = vst.msk [vmem:[#allocation2 + $0x58] sm:$0xff] %vm194, inf
        %207 = vst.msk [vmem:[#allocation2 + $0x60] sm:$0xff] %vm194, inf
        %208 = vst.msk [vmem:[#allocation2 + $0x68] sm:$0xff] %vm194, inf
        %209 = vst.msk [vmem:[#allocation2 + $0x70] sm:$0xff] %vm194, inf
        %210 = vst.msk [vmem:[#allocation2 + $0x78] sm:$0xff] %vm194, inf
        %vm211 = vcmask 0
        %212 = vst.msk [vmem:[#allocation3] sm:$0x1] %vm211, 0.0
      $region32: #{chamfer_distance_loss.1} parent=27 // pred_fallthru
        _
      %v213 = vld [vmem:[%s175] sm:$0xff]
      %v214 = vld [vmem:[%s175 + $0x8] sm:$0xff]
      %v215 = vld [vmem:[%s175 + $0x10] sm:$0xff]
      %v216 = vld [vmem:[%s175 + $0x18] sm:$0xff]
      %v217 = vld [vmem:[%s175 + $0x20] sm:$0xff]
      %v218 = vld [vmem:[%s175 + $0x28] sm:$0xff]
      %v219 = vld [vmem:[%s175 + $0x30] sm:$0xff]
      %v220 = vld [vmem:[%s175 + $0x38] sm:$0xff]
      %v221 = vld [vmem:[%s175 + $0x40] sm:$0xff]
      %v222 = vld [vmem:[%s175 + $0x48] sm:$0xff]
      %v223 = vld [vmem:[%s175 + $0x50] sm:$0xff]
      %v224 = vld [vmem:[%s175 + $0x58] sm:$0xff]
      %v225 = vld [vmem:[%s175 + $0x60] sm:$0xff]
      %v226 = vld [vmem:[%s175 + $0x68] sm:$0xff]
      %v227 = vld [vmem:[%s175 + $0x70] sm:$0xff]
      %v228 = vld [vmem:[%s175 + $0x78] sm:$0xff]
      %v229 = vld [vmem:[%s184] sm:$0x77]
      %v230 = vmul.f32 %v213, %v213
      %v231 = vmul.f32 %v214, %v214
      %v232 = vmul.f32 %v215, %v215
      %v233 = vmul.f32 %v216, %v216
      %v234 = vmul.f32 %v217, %v217
      %v235 = vmul.f32 %v218, %v218
      %v236 = vmul.f32 %v219, %v219
      %v237 = vmul.f32 %v220, %v220
      %v238 = vmul.f32 %v221, %v221
      %v239 = vmul.f32 %v222, %v222
      %v240 = vmul.f32 %v223, %v223
      %v241 = vmul.f32 %v224, %v224
      %v242 = vmul.f32 %v225, %v225
      %v243 = vmul.f32 %v226, %v226
      %v244 = vmul.f32 %v227, %v227
      %v245 = vmul.f32 %v228, %v228
      %vm246 = vcmask 23552
      %v247 = vsel %vm246, %v230, 0.0
      %248 = vadd.xlane.f32.xlu0 %v247
      %v249 = vpop.xlane.xlu0 %248
      %v250 = vsel %vm246, %v231, 0.0
      %251 = vadd.xlane.f32.xlu0 %v250
      %v252 = vpop.xlane.xlu0 %251
      %v253 = vsel %vm246, %v232, 0.0
      %254 = vadd.xlane.f32.xlu0 %v253
      %v255 = vpop.xlane.xlu0 %254
      %v256 = vsel %vm246, %v233, 0.0
      %257 = vadd.xlane.f32.xlu0 %v256
      %v258 = vpop.xlane.xlu0 %257
      %v259 = vsel %vm246, %v234, 0.0
      %260 = vadd.xlane.f32.xlu0 %v259
      %v261 = vpop.xlane.xlu0 %260
      %v262 = vsel %vm246, %v235, 0.0
      %263 = vadd.xlane.f32.xlu0 %v262
      %v264 = vpop.xlane.xlu0 %263
      %v265 = vsel %vm246, %v236, 0.0
      %266 = vadd.xlane.f32.xlu0 %v265
      %v267 = vpop.xlane.xlu0 %266
      %v268 = vsel %vm246, %v237, 0.0
      %269 = vadd.xlane.f32.xlu0 %v268
      %v270 = vpop.xlane.xlu0 %269
      %v271 = vsel %vm246, %v238, 0.0
      %272 = vadd.xlane.f32.xlu0 %v271
      %v273 = vpop.xlane.xlu0 %272
      %v274 = vsel %vm246, %v239, 0.0
      %275 = vadd.xlane.f32.xlu0 %v274
      %v276 = vpop.xlane.xlu0 %275
      %v277 = vsel %vm246, %v240, 0.0
      %278 = vadd.xlane.f32.xlu0 %v277
      %v279 = vpop.xlane.xlu0 %278
      %v280 = vsel %vm246, %v241, 0.0
      %281 = vadd.xlane.f32.xlu0 %v280
      %v282 = vpop.xlane.xlu0 %281
      %v283 = vsel %vm246, %v242, 0.0
      %284 = vadd.xlane.f32.xlu0 %v283
      %v285 = vpop.xlane.xlu0 %284
      %v286 = vsel %vm246, %v243, 0.0
      %287 = vadd.xlane.f32.xlu0 %v286
      %v288 = vpop.xlane.xlu0 %287
      %v289 = vsel %vm246, %v244, 0.0
      %290 = vadd.xlane.f32.xlu0 %v289
      %v291 = vpop.xlane.xlu0 %290
      %v292 = vsel %vm246, %v245, 0.0
      %293 = vadd.xlane.f32.xlu0 %v292
      %v294 = vpop.xlane.xlu0 %293
      %v295 = vmul.f32 %v229, %v229
      %v297 = vcombine.high %v295, %v295
      %vm299 = vcmask 1042432
      %v300 = vsel %vm299, %v295, 0.0
      %v301 = vrot.slane %v300, 4
      %v302 = vadd.f32 %v300, %v301
      %v303 = vrot.slane %v302, 2
      %v304 = vadd.f32 %v302, %v303
      %v305 = vrot.slane %v304, 1
      %v306 = vadd.f32 %v304, %v305
      %v307 = vsel %vm299, %v297, 0.0
      %v308 = vrot.slane %v307, 4
      %v309 = vadd.f32 %v307, %v308
      %v310 = vrot.slane %v309, 2
      %v311 = vadd.f32 %v309, %v310
      %v312 = vrot.slane %v311, 1
      %v313 = vadd.f32 %v311, %v312
      %v314 = vmul.f32 %v213, -2.0
      %v315 = vmul.f32 %v214, -2.0
      %v316 = vmul.f32 %v215, -2.0
      %v317 = vmul.f32 %v216, -2.0
      %v318 = vmul.f32 %v217, -2.0
      %v319 = vmul.f32 %v218, -2.0
      %v320 = vmul.f32 %v219, -2.0
      %v321 = vmul.f32 %v220, -2.0
      %v322 = vmul.f32 %v221, -2.0
      %v323 = vmul.f32 %v222, -2.0
      %v324 = vmul.f32 %v223, -2.0
      %v325 = vmul.f32 %v224, -2.0
      %v326 = vmul.f32 %v225, -2.0
      %v327 = vmul.f32 %v226, -2.0
      %v328 = vmul.f32 %v227, -2.0
      %v329 = vmul.f32 %v228, -2.0
      %v331 = vcombine.high %v229, %v229
      %v333 = vsel %vm246, %v314, 0
      %v336 = vsel %vm246, %v315, 0
      %v339 = vsel %vm246, %v316, 0
      %v342 = vsel %vm246, %v317, 0
      %v345 = vsel %vm246, %v318, 0
      %v348 = vsel %vm246, %v319, 0
      %v351 = vsel %vm246, %v320, 0
      %v354 = vsel %vm246, %v321, 0
      %v357 = vsel %vm246, %v322, 0
      %v360 = vsel %vm246, %v323, 0
      %v363 = vsel %vm246, %v324, 0
      %v366 = vsel %vm246, %v325, 0
      %v369 = vsel %vm246, %v326, 0
      %v372 = vsel %vm246, %v327, 0
      %v375 = vsel %vm246, %v328, 0
      %v378 = vsel %vm246, %v329, 0
      %v380 = vsel %vm299, %v229, 0
      %v382 = vsel %vm299, %v331, 0
      %v384 = vand.u32 %v382, 4294901760
      %385 = vmatprep.subr.mxu0 %v384
      %v386 = vand.u32 %v380, 4294901760
      %387 = vmatpush1.msra.mxu0 %v386
      %388 = vmatprep.subr.mxu0 0.0
      %389 = vmatpush1.msra.mxu0 0.0
      %390 = vmatprep.subr.mxu0 0.0
      %391 = vmatpush1.msra.mxu0 0.0
      %392 = vmatprep.subr.mxu0 0.0
      %393 = vmatpush1.msra.mxu0 0.0
      %394 = vmatprep.subr.mxu0 0.0
      %395 = vmatpush1.msra.mxu0 0.0
      %396 = vmatprep.subr.mxu0 0.0
      %397 = vmatpush1.msra.mxu0 0.0
      %398 = vmatprep.subr.mxu0 0.0
      %399 = vmatpush1.msra.mxu0 0.0
      %400 = vmatprep.subr.mxu0 0.0
      %401 = vmatpush1.msra.mxu0 0.0
      %402 = vmatprep.subr.mxu0 0.0
      %403 = vmatpush1.msra.mxu0 0.0
      %404 = vmatprep.subr.mxu0 0.0
      %405 = vmatpush1.msra.mxu0 0.0
      %406 = vmatprep.subr.mxu0 0.0
      %407 = vmatpush1.msra.mxu0 0.0
      %408 = vmatprep.subr.mxu0 0.0
      %409 = vmatpush1.msra.mxu0 0.0
      %410 = vmatprep.subr.mxu0 0.0
      %411 = vmatpush1.msra.mxu0 0.0
      %412 = vmatprep.subr.mxu0 0.0
      %413 = vmatpush1.msra.mxu0 0.0
      %414 = vmatprep.subr.mxu0 0.0
      %415 = vmatpush1.msra.mxu0 0.0
      %416 = vmatprep.subr.mxu0 0.0
      %417 = vmatpush1.msra.mxu0 0.0
      %418 = vmatprep.subr.mxu0 0.0
      %419 = vmatpush1.msra.mxu0 0.0
      %420 = vmatprep.subr.mxu0 0.0
      %421 = vmatpush1.msra.mxu0 0.0
      %422 = vmatprep.subr.mxu0 0.0
      %423 = vmatpush1.msra.mxu0 0.0
      %424 = vmatprep.subr.mxu0 0.0
      %425 = vmatpush1.msra.mxu0 0.0
      %426 = vmatprep.subr.mxu0 0.0
      %427 = vmatpush1.msra.mxu0 0.0
      %428 = vmatprep.subr.mxu0 0.0
      %429 = vmatpush1.msra.mxu0 0.0
      %430 = vmatprep.subr.mxu0 0.0
      %431 = vmatpush1.msra.mxu0 0.0
      %432 = vmatprep.subr.mxu0 0.0
      %433 = vmatpush1.msra.mxu0 0.0
      %434 = vmatprep.subr.mxu0 0.0
      %435 = vmatpush1.msra.mxu0 0.0
      %436 = vmatprep.subr.mxu0 0.0
      %437 = vmatpush1.msra.mxu0 0.0
      %438 = vmatprep.subr.mxu0 0.0
      %439 = vmatpush1.msra.mxu0 0.0
      %440 = vmatprep.subr.mxu0 0.0
      %441 = vmatpush1.msra.mxu0 0.0
      %442 = vmatprep.subr.mxu0 0.0
      %443 = vmatpush1.msra.mxu0 0.0
      %444 = vmatprep.subr.mxu0 0.0
      %445 = vmatpush1.msra.mxu0 0.0
      %446 = vmatprep.subr.mxu0 0.0
      %447 = vmatpush1.msra.mxu0 0.0
      %448 = vmatprep.subr.mxu0 0.0
      %449 = vmatpush1.msra.mxu0 0.0
      %450 = vmatprep.mubr.f32.mxu0 0.0
      %v451 = vand.u32 %v333, 4294901760
      %v452 = vsub.f32 %v333, %v451
      %v453 = vand.u32 %v452, 4294901760
      %v454 = vsub.f32 %v452, %v453
      %v455 = vand.u32 %v454, 4294901760
      %456 = vmatmul.mubr.f32.gmra.mrb[0].mxu0 %v455
      %v457 = vpop.f32.mrb[0].mxu0
      %v458 = vadd.f32 %v249, %v457
      %v459 = vpop.f32.mrb[0].mxu0
      %v460 = vadd.f32 %v249, %v459
      %461 = vmatprep.mubr.f32.mxu0 0.0
      %v462 = vand.u32 %v336, 4294901760
      %v463 = vsub.f32 %v336, %v462
      %v464 = vand.u32 %v463, 4294901760
      %v465 = vsub.f32 %v463, %v464
      %v466 = vand.u32 %v465, 4294901760
      %467 = vmatmul.mubr.f32.gmra.mrb[0].mxu0 %v466
      %v468 = vpop.f32.mrb[0].mxu0
      %v469 = vadd.f32 %v252, %v468
      %v470 = vpop.f32.mrb[0].mxu0
      %v471 = vadd.f32 %v252, %v470
      %472 = vmatprep.mubr.f32.mxu0 0.0
      %v473 = vand.u32 %v339, 4294901760
      %v474 = vsub.f32 %v339, %v473
      %v475 = vand.u32 %v474, 4294901760
      %v476 = vsub.f32 %v474, %v475
      %v477 = vand.u32 %v476, 4294901760
      %478 = vmatmul.mubr.f32.gmra.mrb[0].mxu0 %v477
      %v479 = vpop.f32.mrb[0].mxu0
      %v480 = vadd.f32 %v255, %v479
      %v481 = vpop.f32.mrb[0].mxu0
      %v482 = vadd.f32 %v255, %v481
      %483 = vmatprep.mubr.f32.mxu0 0.0
      %v484 = vand.u32 %v342, 4294901760
      %v485 = vsub.f32 %v342, %v484
      %v486 = vand.u32 %v485, 4294901760
      %v487 = vsub.f32 %v485, %v486
      %v488 = vand.u32 %v487, 4294901760
      %489 = vmatmul.mubr.f32.gmra.mrb[0].mxu0 %v488
      %v490 = vpop.f32.mrb[0].mxu0
      %v491 = vadd.f32 %v258, %v490
      %v492 = vpop.f32.mrb[0].mxu0
      %v493 = vadd.f32 %v258, %v492
      %494 = vmatprep.mubr.f32.mxu0 0.0
      %v495 = vand.u32 %v345, 4294901760
      %v496 = vsub.f32 %v345, %v495
      %v497 = vand.u32 %v496, 4294901760
      %v498 = vsub.f32 %v496, %v497
      %v499 = vand.u32 %v498, 4294901760
      %500 = vmatmul.mubr.f32.gmra.mrb[0].mxu0 %v499
      %v501 = vpop.f32.mrb[0].mxu0
      %v502 = vadd.f32 %v261, %v501
      %v503 = vpop.f32.mrb[0].mxu0
      %v504 = vadd.f32 %v261, %v503
      %505 = vmatprep.mubr.f32.mxu0 0.0
      %v506 = vand.u32 %v348, 4294901760
      %v507 = vsub.f32 %v348, %v506
      %v508 = vand.u32 %v507, 4294901760
      %v509 = vsub.f32 %v507, %v508
      %v510 = vand.u32 %v509, 4294901760
      %511 = vmatmul.mubr.f32.gmra.mrb[0].mxu0 %v510
      %v512 = vpop.f32.mrb[0].mxu0
      %v513 = vadd.f32 %v264, %v512
      %v514 = vpop.f32.mrb[0].mxu0
      %v515 = vadd.f32 %v264, %v514
      %516 = vmatprep.mubr.f32.mxu0 0.0
      %v517 = vand.u32 %v351, 4294901760
      %v518 = vsub.f32 %v351, %v517
      %v519 = vand.u32 %v518, 4294901760
      %v520 = vsub.f32 %v518, %v519
      %v521 = vand.u32 %v520, 4294901760
      %522 = vmatmul.mubr.f32.gmra.mrb[0].mxu0 %v521
      %v523 = vpop.f32.mrb[0].mxu0
      %v524 = vadd.f32 %v267, %v523
      %v525 = vpop.f32.mrb[0].mxu0
      %v526 = vadd.f32 %v267, %v525
      %527 = vmatprep.mubr.f32.mxu0 0.0
      %v528 = vand.u32 %v354, 4294901760
      %v529 = vsub.f32 %v354, %v528
      %v530 = vand.u32 %v529, 4294901760
      %v531 = vsub.f32 %v529, %v530
      %v532 = vand.u32 %v531, 4294901760
      %533 = vmatmul.mubr.f32.gmra.mrb[0].mxu0 %v532
      %v534 = vpop.f32.mrb[0].mxu0
      %v535 = vadd.f32 %v270, %v534
      %v536 = vpop.f32.mrb[0].mxu0
      %v537 = vadd.f32 %v270, %v536
      %538 = vmatprep.mubr.f32.mxu0 0.0
      %v539 = vand.u32 %v357, 4294901760
      %v540 = vsub.f32 %v357, %v539
      %v541 = vand.u32 %v540, 4294901760
      %v542 = vsub.f32 %v540, %v541
      %v543 = vand.u32 %v542, 4294901760
      %544 = vmatmul.mubr.f32.gmra.mrb[0].mxu0 %v543
      %v545 = vpop.f32.mrb[0].mxu0
      %v546 = vadd.f32 %v273, %v545
      %v547 = vpop.f32.mrb[0].mxu0
      %v548 = vadd.f32 %v273, %v547
      %549 = vmatprep.mubr.f32.mxu0 0.0
      %v550 = vand.u32 %v360, 4294901760
      %v551 = vsub.f32 %v360, %v550
      %v552 = vand.u32 %v551, 4294901760
      %v553 = vsub.f32 %v551, %v552
      %v554 = vand.u32 %v553, 4294901760
      %555 = vmatmul.mubr.f32.gmra.mrb[0].mxu0 %v554
      %v556 = vpop.f32.mrb[0].mxu0
      %v557 = vadd.f32 %v276, %v556
      %v558 = vpop.f32.mrb[0].mxu0
      %v559 = vadd.f32 %v276, %v558
      %560 = vmatprep.mubr.f32.mxu0 0.0
      %v561 = vand.u32 %v363, 4294901760
      %v562 = vsub.f32 %v363, %v561
      %v563 = vand.u32 %v562, 4294901760
      %v564 = vsub.f32 %v562, %v563
      %v565 = vand.u32 %v564, 4294901760
      %566 = vmatmul.mubr.f32.gmra.mrb[0].mxu0 %v565
      %v567 = vpop.f32.mrb[0].mxu0
      %v568 = vadd.f32 %v279, %v567
      %v569 = vpop.f32.mrb[0].mxu0
      %v570 = vadd.f32 %v279, %v569
      %571 = vmatprep.mubr.f32.mxu0 0.0
      %v572 = vand.u32 %v366, 4294901760
      %v573 = vsub.f32 %v366, %v572
      %v574 = vand.u32 %v573, 4294901760
      %v575 = vsub.f32 %v573, %v574
      %v576 = vand.u32 %v575, 4294901760
      %577 = vmatmul.mubr.f32.gmra.mrb[0].mxu0 %v576
      %v578 = vpop.f32.mrb[0].mxu0
      %v579 = vadd.f32 %v282, %v578
      %v580 = vpop.f32.mrb[0].mxu0
      %v581 = vadd.f32 %v282, %v580
      %582 = vmatprep.mubr.f32.mxu0 0.0
      %v583 = vand.u32 %v369, 4294901760
      %v584 = vsub.f32 %v369, %v583
      %v585 = vand.u32 %v584, 4294901760
      %v586 = vsub.f32 %v584, %v585
      %v587 = vand.u32 %v586, 4294901760
      %588 = vmatmul.mubr.f32.gmra.mrb[0].mxu0 %v587
      %v589 = vpop.f32.mrb[0].mxu0
      %v590 = vadd.f32 %v285, %v589
      %v591 = vpop.f32.mrb[0].mxu0
      %v592 = vadd.f32 %v285, %v591
      %593 = vmatprep.mubr.f32.mxu0 0.0
      %v594 = vand.u32 %v372, 4294901760
      %v595 = vsub.f32 %v372, %v594
      %v596 = vand.u32 %v595, 4294901760
      %v597 = vsub.f32 %v595, %v596
      %v598 = vand.u32 %v597, 4294901760
      %599 = vmatmul.mubr.f32.gmra.mrb[0].mxu0 %v598
      %v600 = vpop.f32.mrb[0].mxu0
      %v601 = vadd.f32 %v288, %v600
      %v602 = vpop.f32.mrb[0].mxu0
      %v603 = vadd.f32 %v288, %v602
      %604 = vmatprep.mubr.f32.mxu0 0.0
      %v605 = vand.u32 %v375, 4294901760
      %v606 = vsub.f32 %v375, %v605
      %v607 = vand.u32 %v606, 4294901760
      %v608 = vsub.f32 %v606, %v607
      %v609 = vand.u32 %v608, 4294901760
      %610 = vmatmul.mubr.f32.gmra.mrb[0].mxu0 %v609
      %v611 = vpop.f32.mrb[0].mxu0
      %v612 = vadd.f32 %v291, %v611
      %v613 = vpop.f32.mrb[0].mxu0
      %v614 = vadd.f32 %v291, %v613
      %615 = vmatprep.mubr.f32.mxu0 0.0
      %v616 = vand.u32 %v378, 4294901760
      %v617 = vsub.f32 %v378, %v616
      %v618 = vand.u32 %v617, 4294901760
      %v619 = vsub.f32 %v617, %v618
      %v620 = vand.u32 %v619, 4294901760
      %621 = vmatmul.mubr.f32.gmra.mrb[0].mxu0 %v620
      %v622 = vpop.f32.mrb[0].mxu0
      %v623 = vadd.f32 %v294, %v622
      %v624 = vpop.f32.mrb[0].mxu0
      %v625 = vadd.f32 %v294, %v624
      %626 = vdwg.mxu0
      %v627 = vand.u32 %v382, 4294901760
      %v628 = vsub.f32 %v382, %v627
      %v629 = vand.u32 %v628, 4294901760
      %v630 = vsub.f32 %v628, %v629
      %v631 = vand.u32 %v630, 4294901760
      %632 = vmatprep.subr.mxu0 %v631
      %v633 = vand.u32 %v380, 4294901760
      %v634 = vsub.f32 %v380, %v633
      %v635 = vand.u32 %v634, 4294901760
      %v636 = vsub.f32 %v634, %v635
      %v637 = vand.u32 %v636, 4294901760
      %638 = vmatpush1.msra.mxu0 %v637
      %639 = vmatprep.subr.mxu0 0.0
      %640 = vmatpush1.msra.mxu0 0.0
      %641 = vmatprep.subr.mxu0 0.0
      %642 = vmatpush1.msra.mxu0 0.0
      %643 = vmatprep.subr.mxu0 0.0
      %644 = vmatpush1.msra.mxu0 0.0
      %645 = vmatprep.subr.mxu0 0.0
      %646 = vmatpush1.msra.mxu0 0.0
      %647 = vmatprep.subr.mxu0 0.0
      %648 = vmatpush1.msra.mxu0 0.0
      %649 = vmatprep.subr.mxu0 0.0
      %650 = vmatpush1.msra.mxu0 0.0
      %651 = vmatprep.subr.mxu0 0.0
      %652 = vmatpush1.msra.mxu0 0.0
      %653 = vmatprep.subr.mxu0 0.0
      %654 = vmatpush1.msra.mxu0 0.0
      %655 = vmatprep.subr.mxu0 0.0
      %656 = vmatpush1.msra.mxu0 0.0
      %657 = vmatprep.subr.mxu0 0.0
      %658 = vmatpush1.msra.mxu0 0.0
      %659 = vmatprep.subr.mxu0 0.0
      %660 = vmatpush1.msra.mxu0 0.0
      %661 = vmatprep.subr.mxu0 0.0
      %662 = vmatpush1.msra.mxu0 0.0
      %663 = vmatprep.subr.mxu0 0.0
      %664 = vmatpush1.msra.mxu0 0.0
      %665 = vmatprep.subr.mxu0 0.0
      %666 = vmatpush1.msra.mxu0 0.0
      %667 = vmatprep.subr.mxu0 0.0
      %668 = vmatpush1.msra.mxu0 0.0
      %669 = vmatprep.subr.mxu0 0.0
      %670 = vmatpush1.msra.mxu0 0.0
      %671 = vmatprep.subr.mxu0 0.0
      %672 = vmatpush1.msra.mxu0 0.0
      %673 = vmatprep.subr.mxu0 0.0
      %674 = vmatpush1.msra.mxu0 0.0
      %675 = vmatprep.subr.mxu0 0.0
      %676 = vmatpush1.msra.mxu0 0.0
      %677 = vmatprep.subr.mxu0 0.0
      %678 = vmatpush1.msra.mxu0 0.0
      %679 = vmatprep.subr.mxu0 0.0
      %680 = vmatpush1.msra.mxu0 0.0
      %681 = vmatprep.subr.mxu0 0.0
      %682 = vmatpush1.msra.mxu0 0.0
      %683 = vmatprep.subr.mxu0 0.0
      %684 = vmatpush1.msra.mxu0 0.0
      %685 = vmatprep.subr.mxu0 0.0
      %686 = vmatpush1.msra.mxu0 0.0
      %687 = vmatprep.subr.mxu0 0.0
      %688 = vmatpush1.msra.mxu0 0.0
      %689 = vmatprep.subr.mxu0 0.0
      %690 = vmatpush1.msra.mxu0 0.0
      %691 = vmatprep.subr.mxu0 0.0
      %692 = vmatpush1.msra.mxu0 0.0
      %693 = vmatprep.subr.mxu0 0.0
      %694 = vmatpush1.msra.mxu0 0.0
      %695 = vmatprep.subr.mxu0 0.0
      %696 = vmatpush1.msra.mxu0 0.0
      %697 = vmatprep.subr.mxu0 0.0
      %698 = vmatpush1.msra.mxu0 0.0
      %699 = vmatprep.subr.mxu0 0.0
      %700 = vmatpush1.msra.mxu0 0.0
      %701 = vmatprep.mubr.f32.mxu0 0.0
      %v702 = vand.u32 %v333, 4294901760
      %703 = vmatmul.mubr.f32.gmra.mrb[0].mxu0 %v702
      %v704 = vpop.f32.mrb[0].mxu0
      %v705 = vadd.f32 %v458, %v704
      %v706 = vpop.f32.mrb[0].mxu0
      %v707 = vadd.f32 %v460, %v706
      %708 = vmatprep.mubr.f32.mxu0 0.0
      %v709 = vand.u32 %v336, 4294901760
      %710 = vmatmul.mubr.f32.gmra.mrb[0].mxu0 %v709
      %v711 = vpop.f32.mrb[0].mxu0
      %v712 = vadd.f32 %v469, %v711
      %v713 = vpop.f32.mrb[0].mxu0
      %v714 = vadd.f32 %v471, %v713
      %715 = vmatprep.mubr.f32.mxu0 0.0
      %v716 = vand.u32 %v339, 4294901760
      %717 = vmatmul.mubr.f32.gmra.mrb[0].mxu0 %v716
      %v718 = vpop.f32.mrb[0].mxu0
      %v719 = vadd.f32 %v480, %v718
      %v720 = vpop.f32.mrb[0].mxu0
      %v721 = vadd.f32 %v482, %v720
      %722 = vmatprep.mubr.f32.mxu0 0.0
      %v723 = vand.u32 %v342, 4294901760
      %724 = vmatmul.mubr.f32.gmra.mrb[0].mxu0 %v723
      %v725 = vpop.f32.mrb[0].mxu0
      %v726 = vadd.f32 %v491, %v725
      %v727 = vpop.f32.mrb[0].mxu0
      %v728 = vadd.f32 %v493, %v727
      %729 = vmatprep.mubr.f32.mxu0 0.0
      %v730 = vand.u32 %v345, 4294901760
      %731 = vmatmul.mubr.f32.gmra.mrb[0].mxu0 %v730
      %v732 = vpop.f32.mrb[0].mxu0
      %v733 = vadd.f32 %v502, %v732
      %v734 = vpop.f32.mrb[0].mxu0
      %v735 = vadd.f32 %v504, %v734
      %736 = vmatprep.mubr.f32.mxu0 0.0
      %v737 = vand.u32 %v348, 4294901760
      %738 = vmatmul.mubr.f32.gmra.mrb[0].mxu0 %v737
      %v739 = vpop.f32.mrb[0].mxu0
      %v740 = vadd.f32 %v513, %v739
      %v741 = vpop.f32.mrb[0].mxu0
      %v742 = vadd.f32 %v515, %v741
      %743 = vmatprep.mubr.f32.mxu0 0.0
      %v744 = vand.u32 %v351, 4294901760
      %745 = vmatmul.mubr.f32.gmra.mrb[0].mxu0 %v744
      %v746 = vpop.f32.mrb[0].mxu0
      %v747 = vadd.f32 %v524, %v746
      %v748 = vpop.f32.mrb[0].mxu0
      %v749 = vadd.f32 %v526, %v748
      %750 = vmatprep.mubr.f32.mxu0 0.0
      %v751 = vand.u32 %v354, 4294901760
      %752 = vmatmul.mubr.f32.gmra.mrb[0].mxu0 %v751
      %v753 = vpop.f32.mrb[0].mxu0
      %v754 = vadd.f32 %v535, %v753
      %v755 = vpop.f32.mrb[0].mxu0
      %v756 = vadd.f32 %v537, %v755
      %757 = vmatprep.mubr.f32.mxu0 0.0
      %v758 = vand.u32 %v357, 4294901760
      %759 = vmatmul.mubr.f32.gmra.mrb[0].mxu0 %v758
      %v760 = vpop.f32.mrb[0].mxu0
      %v761 = vadd.f32 %v546, %v760
      %v762 = vpop.f32.mrb[0].mxu0
      %v763 = vadd.f32 %v548, %v762
      %764 = vmatprep.mubr.f32.mxu0 0.0
      %v765 = vand.u32 %v360, 4294901760
      %766 = vmatmul.mubr.f32.gmra.mrb[0].mxu0 %v765
      %v767 = vpop.f32.mrb[0].mxu0
      %v768 = vadd.f32 %v557, %v767
      %v769 = vpop.f32.mrb[0].mxu0
      %v770 = vadd.f32 %v559, %v769
      %771 = vmatprep.mubr.f32.mxu0 0.0
      %v772 = vand.u32 %v363, 4294901760
      %773 = vmatmul.mubr.f32.gmra.mrb[0].mxu0 %v772
      %v774 = vpop.f32.mrb[0].mxu0
      %v775 = vadd.f32 %v568, %v774
      %v776 = vpop.f32.mrb[0].mxu0
      %v777 = vadd.f32 %v570, %v776
      %778 = vmatprep.mubr.f32.mxu0 0.0
      %v779 = vand.u32 %v366, 4294901760
      %780 = vmatmul.mubr.f32.gmra.mrb[0].mxu0 %v779
      %v781 = vpop.f32.mrb[0].mxu0
      %v782 = vadd.f32 %v579, %v781
      %v783 = vpop.f32.mrb[0].mxu0
      %v784 = vadd.f32 %v581, %v783
      %785 = vmatprep.mubr.f32.mxu0 0.0
      %v786 = vand.u32 %v369, 4294901760
      %787 = vmatmul.mubr.f32.gmra.mrb[0].mxu0 %v786
      %v788 = vpop.f32.mrb[0].mxu0
      %v789 = vadd.f32 %v590, %v788
      %v790 = vpop.f32.mrb[0].mxu0
      %v791 = vadd.f32 %v592, %v790
      %792 = vmatprep.mubr.f32.mxu0 0.0
      %v793 = vand.u32 %v372, 4294901760
      %794 = vmatmul.mubr.f32.gmra.mrb[0].mxu0 %v793
      %v795 = vpop.f32.mrb[0].mxu0
      %v796 = vadd.f32 %v601, %v795
      %v797 = vpop.f32.mrb[0].mxu0
      %v798 = vadd.f32 %v603, %v797
      %799 = vmatprep.mubr.f32.mxu0 0.0
      %v800 = vand.u32 %v375, 4294901760
      %801 = vmatmul.mubr.f32.gmra.mrb[0].mxu0 %v800
      %v802 = vpop.f32.mrb[0].mxu0
      %v803 = vadd.f32 %v612, %v802
      %v804 = vpop.f32.mrb[0].mxu0
      %v805 = vadd.f32 %v614, %v804
      %806 = vmatprep.mubr.f32.mxu0 0.0
      %v807 = vand.u32 %v378, 4294901760
      %808 = vmatmul.mubr.f32.gmra.mrb[0].mxu0 %v807
      %v809 = vpop.f32.mrb[0].mxu0
      %v810 = vadd.f32 %v623, %v809
      %v811 = vpop.f32.mrb[0].mxu0
      %v812 = vadd.f32 %v625, %v811
      %813 = vdwg.mxu0
      %v814 = vand.u32 %v382, 4294901760
      %v815 = vsub.f32 %v382, %v814
      %816 = vmatprep.subr.mxu0 %v815
      %v817 = vand.u32 %v380, 4294901760
      %v818 = vsub.f32 %v380, %v817
      %819 = vmatpush1.msra.mxu0 %v818
      %820 = vmatprep.subr.mxu0 0.0
      %821 = vmatpush1.msra.mxu0 0.0
      %822 = vmatprep.subr.mxu0 0.0
      %823 = vmatpush1.msra.mxu0 0.0
      %824 = vmatprep.subr.mxu0 0.0
      %825 = vmatpush1.msra.mxu0 0.0
      %826 = vmatprep.subr.mxu0 0.0
      %827 = vmatpush1.msra.mxu0 0.0
      %828 = vmatprep.subr.mxu0 0.0
      %829 = vmatpush1.msra.mxu0 0.0
      %830 = vmatprep.subr.mxu0 0.0
      %831 = vmatpush1.msra.mxu0 0.0
      %832 = vmatprep.subr.mxu0 0.0
      %833 = vmatpush1.msra.mxu0 0.0
      %834 = vmatprep.subr.mxu0 0.0
      %835 = vmatpush1.msra.mxu0 0.0
      %836 = vmatprep.subr.mxu0 0.0
      %837 = vmatpush1.msra.mxu0 0.0
      %838 = vmatprep.subr.mxu0 0.0
      %839 = vmatpush1.msra.mxu0 0.0
      %840 = vmatprep.subr.mxu0 0.0
      %841 = vmatpush1.msra.mxu0 0.0
      %842 = vmatprep.subr.mxu0 0.0
      %843 = vmatpush1.msra.mxu0 0.0
      %844 = vmatprep.subr.mxu0 0.0
      %845 = vmatpush1.msra.mxu0 0.0
      %846 = vmatprep.subr.mxu0 0.0
      %847 = vmatpush1.msra.mxu0 0.0
      %848 = vmatprep.subr.mxu0 0.0
      %849 = vmatpush1.msra.mxu0 0.0
      %850 = vmatprep.subr.mxu0 0.0
      %851 = vmatpush1.msra.mxu0 0.0
      %852 = vmatprep.subr.mxu0 0.0
      %853 = vmatpush1.msra.mxu0 0.0
      %854 = vmatprep.subr.mxu0 0.0
      %855 = vmatpush1.msra.mxu0 0.0
      %856 = vmatprep.subr.mxu0 0.0
      %857 = vmatpush1.msra.mxu0 0.0
      %858 = vmatprep.subr.mxu0 0.0
      %859 = vmatpush1.msra.mxu0 0.0
      %860 = vmatprep.subr.mxu0 0.0
      %861 = vmatpush1.msra.mxu0 0.0
      %862 = vmatprep.subr.mxu0 0.0
      %863 = vmatpush1.msra.mxu0 0.0
      %864 = vmatprep.subr.mxu0 0.0
      %865 = vmatpush1.msra.mxu0 0.0
      %866 = vmatprep.subr.mxu0 0.0
      %867 = vmatpush1.msra.mxu0 0.0
      %868 = vmatprep.subr.mxu0 0.0
      %869 = vmatpush1.msra.mxu0 0.0
      %870 = vmatprep.subr.mxu0 0.0
      %871 = vmatpush1.msra.mxu0 0.0
      %872 = vmatprep.subr.mxu0 0.0
      %873 = vmatpush1.msra.mxu0 0.0
      %874 = vmatprep.subr.mxu0 0.0
      %875 = vmatpush1.msra.mxu0 0.0
      %876 = vmatprep.subr.mxu0 0.0
      %877 = vmatpush1.msra.mxu0 0.0
      %878 = vmatprep.subr.mxu0 0.0
      %879 = vmatpush1.msra.mxu0 0.0
      %880 = vmatprep.subr.mxu0 0.0
      %881 = vmatpush1.msra.mxu0 0.0
      %882 = vmatprep.mubr.f32.mxu0 0.0
      %v883 = vand.u32 %v333, 4294901760
      %v884 = vsub.f32 %v333, %v883
      %885 = vmatmul.mubr.f32.gmra.mrb[0].mxu0 %v884
      %v886 = vpop.f32.mrb[0].mxu0
      %v887 = vadd.f32 %v705, %v886
      %v888 = vpop.f32.mrb[0].mxu0
      %v889 = vadd.f32 %v707, %v888
      %890 = vmatprep.mubr.f32.mxu0 0.0
      %v891 = vand.u32 %v336, 4294901760
      %v892 = vsub.f32 %v336, %v891
      %893 = vmatmul.mubr.f32.gmra.mrb[0].mxu0 %v892
      %v894 = vpop.f32.mrb[0].mxu0
      %v895 = vadd.f32 %v712, %v894
      %v896 = vpop.f32.mrb[0].mxu0
      %v897 = vadd.f32 %v714, %v896
      %898 = vmatprep.mubr.f32.mxu0 0.0
      %v899 = vand.u32 %v339, 4294901760
      %v900 = vsub.f32 %v339, %v899
      %901 = vmatmul.mubr.f32.gmra.mrb[0].mxu0 %v900
      %v902 = vpop.f32.mrb[0].mxu0
      %v903 = vadd.f32 %v719, %v902
      %v904 = vpop.f32.mrb[0].mxu0
      %v905 = vadd.f32 %v721, %v904
      %906 = vmatprep.mubr.f32.mxu0 0.0
      %v907 = vand.u32 %v342, 4294901760
      %v908 = vsub.f32 %v342, %v907
      %909 = vmatmul.mubr.f32.gmra.mrb[0].mxu0 %v908
      %v910 = vpop.f32.mrb[0].mxu0
      %v911 = vadd.f32 %v726, %v910
      %v912 = vpop.f32.mrb[0].mxu0
      %v913 = vadd.f32 %v728, %v912
      %914 = vmatprep.mubr.f32.mxu0 0.0
      %v915 = vand.u32 %v345, 4294901760
      %v916 = vsub.f32 %v345, %v915
      %917 = vmatmul.mubr.f32.gmra.mrb[0].mxu0 %v916
      %v918 = vpop.f32.mrb[0].mxu0
      %v919 = vadd.f32 %v733, %v918
      %v920 = vpop.f32.mrb[0].mxu0
      %v921 = vadd.f32 %v735, %v920
      %922 = vmatprep.mubr.f32.mxu0 0.0
      %v923 = vand.u32 %v348, 4294901760
      %v924 = vsub.f32 %v348, %v923
      %925 = vmatmul.mubr.f32.gmra.mrb[0].mxu0 %v924
      %v926 = vpop.f32.mrb[0].mxu0
      %v927 = vadd.f32 %v740, %v926
      %v928 = vpop.f32.mrb[0].mxu0
      %v929 = vadd.f32 %v742, %v928
      %930 = vmatprep.mubr.f32.mxu0 0.0
      %v931 = vand.u32 %v351, 4294901760
      %v932 = vsub.f32 %v351, %v931
      %933 = vmatmul.mubr.f32.gmra.mrb[0].mxu0 %v932
      %v934 = vpop.f32.mrb[0].mxu0
      %v935 = vadd.f32 %v747, %v934
      %v936 = vpop.f32.mrb[0].mxu0
      %v937 = vadd.f32 %v749, %v936
      %938 = vmatprep.mubr.f32.mxu0 0.0
      %v939 = vand.u32 %v354, 4294901760
      %v940 = vsub.f32 %v354, %v939
      %941 = vmatmul.mubr.f32.gmra.mrb[0].mxu0 %v940
      %v942 = vpop.f32.mrb[0].mxu0
      %v943 = vadd.f32 %v754, %v942
      %v944 = vpop.f32.mrb[0].mxu0
      %v945 = vadd.f32 %v756, %v944
      %946 = vmatprep.mubr.f32.mxu0 0.0
      %v947 = vand.u32 %v357, 4294901760
      %v948 = vsub.f32 %v357, %v947
      %949 = vmatmul.mubr.f32.gmra.mrb[0].mxu0 %v948
      %v950 = vpop.f32.mrb[0].mxu0
      %v951 = vadd.f32 %v761, %v950
      %v952 = vpop.f32.mrb[0].mxu0
      %v953 = vadd.f32 %v763, %v952
      %954 = vmatprep.mubr.f32.mxu0 0.0
      %v955 = vand.u32 %v360, 4294901760
      %v956 = vsub.f32 %v360, %v955
      %957 = vmatmul.mubr.f32.gmra.mrb[0].mxu0 %v956
      %v958 = vpop.f32.mrb[0].mxu0
      %v959 = vadd.f32 %v768, %v958
      %v960 = vpop.f32.mrb[0].mxu0
      %v961 = vadd.f32 %v770, %v960
      %962 = vmatprep.mubr.f32.mxu0 0.0
      %v963 = vand.u32 %v363, 4294901760
      %v964 = vsub.f32 %v363, %v963
      %965 = vmatmul.mubr.f32.gmra.mrb[0].mxu0 %v964
      %v966 = vpop.f32.mrb[0].mxu0
      %v967 = vadd.f32 %v775, %v966
      %v968 = vpop.f32.mrb[0].mxu0
      %v969 = vadd.f32 %v777, %v968
      %970 = vmatprep.mubr.f32.mxu0 0.0
      %v971 = vand.u32 %v366, 4294901760
      %v972 = vsub.f32 %v366, %v971
      %973 = vmatmul.mubr.f32.gmra.mrb[0].mxu0 %v972
      %v974 = vpop.f32.mrb[0].mxu0
      %v975 = vadd.f32 %v782, %v974
      %v976 = vpop.f32.mrb[0].mxu0
      %v977 = vadd.f32 %v784, %v976
      %978 = vmatprep.mubr.f32.mxu0 0.0
      %v979 = vand.u32 %v369, 4294901760
      %v980 = vsub.f32 %v369, %v979
      %981 = vmatmul.mubr.f32.gmra.mrb[0].mxu0 %v980
      %v982 = vpop.f32.mrb[0].mxu0
      %v983 = vadd.f32 %v789, %v982
      %v984 = vpop.f32.mrb[0].mxu0
      %v985 = vadd.f32 %v791, %v984
      %986 = vmatprep.mubr.f32.mxu0 0.0
      %v987 = vand.u32 %v372, 4294901760
      %v988 = vsub.f32 %v372, %v987
      %989 = vmatmul.mubr.f32.gmra.mrb[0].mxu0 %v988
      %v990 = vpop.f32.mrb[0].mxu0
      %v991 = vadd.f32 %v796, %v990
      %v992 = vpop.f32.mrb[0].mxu0
      %v993 = vadd.f32 %v798, %v992
      %994 = vmatprep.mubr.f32.mxu0 0.0
      %v995 = vand.u32 %v375, 4294901760
      %v996 = vsub.f32 %v375, %v995
      %997 = vmatmul.mubr.f32.gmra.mrb[0].mxu0 %v996
      %v998 = vpop.f32.mrb[0].mxu0
      %v999 = vadd.f32 %v803, %v998
      %v1000 = vpop.f32.mrb[0].mxu0
      %v1001 = vadd.f32 %v805, %v1000
      %1002 = vmatprep.mubr.f32.mxu0 0.0
      %v1003 = vand.u32 %v378, 4294901760
      %v1004 = vsub.f32 %v378, %v1003
      %1005 = vmatmul.mubr.f32.gmra.mrb[0].mxu0 %v1004
      %v1006 = vpop.f32.mrb[0].mxu0
      %v1007 = vadd.f32 %v810, %v1006
      %v1008 = vpop.f32.mrb[0].mxu0
      %v1009 = vadd.f32 %v812, %v1008
      %1010 = vdwg.mxu0
      %v1011 = vand.u32 %v382, 4294901760
      %1012 = vmatprep.subr.mxu0 %v1011
      %v1013 = vand.u32 %v380, 4294901760
      %1014 = vmatpush1.msra.mxu0 %v1013
      %1015 = vmatprep.subr.mxu0 0.0
      %1016 = vmatpush1.msra.mxu0 0.0
      %1017 = vmatprep.subr.mxu0 0.0
      %1018 = vmatpush1.msra.mxu0 0.0
      %1019 = vmatprep.subr.mxu0 0.0
      %1020 = vmatpush1.msra.mxu0 0.0
      %1021 = vmatprep.subr.mxu0 0.0
      %1022 = vmatpush1.msra.mxu0 0.0
      %1023 = vmatprep.subr.mxu0 0.0
      %1024 = vmatpush1.msra.mxu0 0.0
      %1025 = vmatprep.subr.mxu0 0.0
      %1026 = vmatpush1.msra.mxu0 0.0
      %1027 = vmatprep.subr.mxu0 0.0
      %1028 = vmatpush1.msra.mxu0 0.0
      %1029 = vmatprep.subr.mxu0 0.0
      %1030 = vmatpush1.msra.mxu0 0.0
      %1031 = vmatprep.subr.mxu0 0.0
      %1032 = vmatpush1.msra.mxu0 0.0
      %1033 = vmatprep.subr.mxu0 0.0
      %1034 = vmatpush1.msra.mxu0 0.0
      %1035 = vmatprep.subr.mxu0 0.0
      %1036 = vmatpush1.msra.mxu0 0.0
      %1037 = vmatprep.subr.mxu0 0.0
      %1038 = vmatpush1.msra.mxu0 0.0
      %1039 = vmatprep.subr.mxu0 0.0
      %1040 = vmatpush1.msra.mxu0 0.0
      %1041 = vmatprep.subr.mxu0 0.0
      %1042 = vmatpush1.msra.mxu0 0.0
      %1043 = vmatprep.subr.mxu0 0.0
      %1044 = vmatpush1.msra.mxu0 0.0
      %1045 = vmatprep.subr.mxu0 0.0
      %1046 = vmatpush1.msra.mxu0 0.0
      %1047 = vmatprep.subr.mxu0 0.0
      %1048 = vmatpush1.msra.mxu0 0.0
      %1049 = vmatprep.subr.mxu0 0.0
      %1050 = vmatpush1.msra.mxu0 0.0
      %1051 = vmatprep.subr.mxu0 0.0
      %1052 = vmatpush1.msra.mxu0 0.0
      %1053 = vmatprep.subr.mxu0 0.0
      %1054 = vmatpush1.msra.mxu0 0.0
      %1055 = vmatprep.subr.mxu0 0.0
      %1056 = vmatpush1.msra.mxu0 0.0
      %1057 = vmatprep.subr.mxu0 0.0
      %1058 = vmatpush1.msra.mxu0 0.0
      %1059 = vmatprep.subr.mxu0 0.0
      %1060 = vmatpush1.msra.mxu0 0.0
      %1061 = vmatprep.subr.mxu0 0.0
      %1062 = vmatpush1.msra.mxu0 0.0
      %1063 = vmatprep.subr.mxu0 0.0
      %1064 = vmatpush1.msra.mxu0 0.0
      %1065 = vmatprep.subr.mxu0 0.0
      %1066 = vmatpush1.msra.mxu0 0.0
      %1067 = vmatprep.subr.mxu0 0.0
      %1068 = vmatpush1.msra.mxu0 0.0
      %1069 = vmatprep.subr.mxu0 0.0
      %1070 = vmatpush1.msra.mxu0 0.0
      %1071 = vmatprep.subr.mxu0 0.0
      %1072 = vmatpush1.msra.mxu0 0.0
      %1073 = vmatprep.subr.mxu0 0.0
      %1074 = vmatpush1.msra.mxu0 0.0
      %1075 = vmatprep.subr.mxu0 0.0
      %1076 = vmatpush1.msra.mxu0 0.0
      %1077 = vmatprep.mubr.f32.mxu0 0.0
      %v1078 = vand.u32 %v333, 4294901760
      %v1079 = vsub.f32 %v333, %v1078
      %v1080 = vand.u32 %v1079, 4294901760
      %1081 = vmatmul.mubr.f32.gmra.mrb[0].mxu0 %v1080
      %v1082 = vpop.f32.mrb[0].mxu0
      %v1083 = vadd.f32 %v887, %v1082
      %v1084 = vpop.f32.mrb[0].mxu0
      %v1085 = vadd.f32 %v889, %v1084
      %1086 = vmatprep.mubr.f32.mxu0 0.0
      %v1087 = vand.u32 %v336, 4294901760
      %v1088 = vsub.f32 %v336, %v1087
      %v1089 = vand.u32 %v1088, 4294901760
      %1090 = vmatmul.mubr.f32.gmra.mrb[0].mxu0 %v1089
      %v1091 = vpop.f32.mrb[0].mxu0
      %v1092 = vadd.f32 %v895, %v1091
      %v1093 = vpop.f32.mrb[0].mxu0
      %v1094 = vadd.f32 %v897, %v1093
      %1095 = vmatprep.mubr.f32.mxu0 0.0
      %v1096 = vand.u32 %v339, 4294901760
      %v1097 = vsub.f32 %v339, %v1096
      %v1098 = vand.u32 %v1097, 4294901760
      %1099 = vmatmul.mubr.f32.gmra.mrb[0].mxu0 %v1098
      %v1100 = vpop.f32.mrb[0].mxu0
      %v1101 = vadd.f32 %v903, %v1100
      %v1102 = vpop.f32.mrb[0].mxu0
      %v1103 = vadd.f32 %v905, %v1102
      %1104 = vmatprep.mubr.f32.mxu0 0.0
      %v1105 = vand.u32 %v342, 4294901760
      %v1106 = vsub.f32 %v342, %v1105
      %v1107 = vand.u32 %v1106, 4294901760
      %1108 = vmatmul.mubr.f32.gmra.mrb[0].mxu0 %v1107
      %v1109 = vpop.f32.mrb[0].mxu0
      %v1110 = vadd.f32 %v911, %v1109
      %v1111 = vpop.f32.mrb[0].mxu0
      %v1112 = vadd.f32 %v913, %v1111
      %1113 = vmatprep.mubr.f32.mxu0 0.0
      %v1114 = vand.u32 %v345, 4294901760
      %v1115 = vsub.f32 %v345, %v1114
      %v1116 = vand.u32 %v1115, 4294901760
      %1117 = vmatmul.mubr.f32.gmra.mrb[0].mxu0 %v1116
      %v1118 = vpop.f32.mrb[0].mxu0
      %v1119 = vadd.f32 %v919, %v1118
      %v1120 = vpop.f32.mrb[0].mxu0
      %v1121 = vadd.f32 %v921, %v1120
      %1122 = vmatprep.mubr.f32.mxu0 0.0
      %v1123 = vand.u32 %v348, 4294901760
      %v1124 = vsub.f32 %v348, %v1123
      %v1125 = vand.u32 %v1124, 4294901760
      %1126 = vmatmul.mubr.f32.gmra.mrb[0].mxu0 %v1125
      %v1127 = vpop.f32.mrb[0].mxu0
      %v1128 = vadd.f32 %v927, %v1127
      %v1129 = vpop.f32.mrb[0].mxu0
      %v1130 = vadd.f32 %v929, %v1129
      %1131 = vmatprep.mubr.f32.mxu0 0.0
      %v1132 = vand.u32 %v351, 4294901760
      %v1133 = vsub.f32 %v351, %v1132
      %v1134 = vand.u32 %v1133, 4294901760
      %1135 = vmatmul.mubr.f32.gmra.mrb[0].mxu0 %v1134
      %v1136 = vpop.f32.mrb[0].mxu0
      %v1137 = vadd.f32 %v935, %v1136
      %v1138 = vpop.f32.mrb[0].mxu0
      %v1139 = vadd.f32 %v937, %v1138
      %1140 = vmatprep.mubr.f32.mxu0 0.0
      %v1141 = vand.u32 %v354, 4294901760
      %v1142 = vsub.f32 %v354, %v1141
      %v1143 = vand.u32 %v1142, 4294901760
      %1144 = vmatmul.mubr.f32.gmra.mrb[0].mxu0 %v1143
      %v1145 = vpop.f32.mrb[0].mxu0
      %v1146 = vadd.f32 %v943, %v1145
      %v1147 = vpop.f32.mrb[0].mxu0
      %v1148 = vadd.f32 %v945, %v1147
      %1149 = vmatprep.mubr.f32.mxu0 0.0
      %v1150 = vand.u32 %v357, 4294901760
      %v1151 = vsub.f32 %v357, %v1150
      %v1152 = vand.u32 %v1151, 4294901760
      %1153 = vmatmul.mubr.f32.gmra.mrb[0].mxu0 %v1152
      %v1154 = vpop.f32.mrb[0].mxu0
      %v1155 = vadd.f32 %v951, %v1154
      %v1156 = vpop.f32.mrb[0].mxu0
      %v1157 = vadd.f32 %v953, %v1156
      %1158 = vmatprep.mubr.f32.mxu0 0.0
      %v1159 = vand.u32 %v360, 4294901760
      %v1160 = vsub.f32 %v360, %v1159
      %v1161 = vand.u32 %v1160, 4294901760
      %1162 = vmatmul.mubr.f32.gmra.mrb[0].mxu0 %v1161
      %v1163 = vpop.f32.mrb[0].mxu0
      %v1164 = vadd.f32 %v959, %v1163
      %v1165 = vpop.f32.mrb[0].mxu0
      %v1166 = vadd.f32 %v961, %v1165
      %1167 = vmatprep.mubr.f32.mxu0 0.0
      %v1168 = vand.u32 %v363, 4294901760
      %v1169 = vsub.f32 %v363, %v1168
      %v1170 = vand.u32 %v1169, 4294901760
      %1171 = vmatmul.mubr.f32.gmra.mrb[0].mxu0 %v1170
      %v1172 = vpop.f32.mrb[0].mxu0
      %v1173 = vadd.f32 %v967, %v1172
      %v1174 = vpop.f32.mrb[0].mxu0
      %v1175 = vadd.f32 %v969, %v1174
      %1176 = vmatprep.mubr.f32.mxu0 0.0
      %v1177 = vand.u32 %v366, 4294901760
      %v1178 = vsub.f32 %v366, %v1177
      %v1179 = vand.u32 %v1178, 4294901760
      %1180 = vmatmul.mubr.f32.gmra.mrb[0].mxu0 %v1179
      %v1181 = vpop.f32.mrb[0].mxu0
      %v1182 = vadd.f32 %v975, %v1181
      %v1183 = vpop.f32.mrb[0].mxu0
      %v1184 = vadd.f32 %v977, %v1183
      %1185 = vmatprep.mubr.f32.mxu0 0.0
      %v1186 = vand.u32 %v369, 4294901760
      %v1187 = vsub.f32 %v369, %v1186
      %v1188 = vand.u32 %v1187, 4294901760
      %1189 = vmatmul.mubr.f32.gmra.mrb[0].mxu0 %v1188
      %v1190 = vpop.f32.mrb[0].mxu0
      %v1191 = vadd.f32 %v983, %v1190
      %v1192 = vpop.f32.mrb[0].mxu0
      %v1193 = vadd.f32 %v985, %v1192
      %1194 = vmatprep.mubr.f32.mxu0 0.0
      %v1195 = vand.u32 %v372, 4294901760
      %v1196 = vsub.f32 %v372, %v1195
      %v1197 = vand.u32 %v1196, 4294901760
      %1198 = vmatmul.mubr.f32.gmra.mrb[0].mxu0 %v1197
      %v1199 = vpop.f32.mrb[0].mxu0
      %v1200 = vadd.f32 %v991, %v1199
      %v1201 = vpop.f32.mrb[0].mxu0
      %v1202 = vadd.f32 %v993, %v1201
      %1203 = vmatprep.mubr.f32.mxu0 0.0
      %v1204 = vand.u32 %v375, 4294901760
      %v1205 = vsub.f32 %v375, %v1204
      %v1206 = vand.u32 %v1205, 4294901760
      %1207 = vmatmul.mubr.f32.gmra.mrb[0].mxu0 %v1206
      %v1208 = vpop.f32.mrb[0].mxu0
      %v1209 = vadd.f32 %v999, %v1208
      %v1210 = vpop.f32.mrb[0].mxu0
      %v1211 = vadd.f32 %v1001, %v1210
      %1212 = vmatprep.mubr.f32.mxu0 0.0
      %v1213 = vand.u32 %v378, 4294901760
      %v1214 = vsub.f32 %v378, %v1213
      %v1215 = vand.u32 %v1214, 4294901760
      %1216 = vmatmul.mubr.f32.gmra.mrb[0].mxu0 %v1215
      %v1217 = vpop.f32.mrb[0].mxu0
      %v1218 = vadd.f32 %v1007, %v1217
      %v1219 = vpop.f32.mrb[0].mxu0
      %v1220 = vadd.f32 %v1009, %v1219
      %1221 = vdwg.mxu0
      %v1222 = vand.u32 %v382, 4294901760
      %v1223 = vsub.f32 %v382, %v1222
      %v1224 = vand.u32 %v1223, 4294901760
      %1225 = vmatprep.subr.mxu0 %v1224
      %v1226 = vand.u32 %v380, 4294901760
      %v1227 = vsub.f32 %v380, %v1226
      %v1228 = vand.u32 %v1227, 4294901760
      %1229 = vmatpush1.msra.mxu0 %v1228
      %1230 = vmatprep.subr.mxu0 0.0
      %1231 = vmatpush1.msra.mxu0 0.0
      %1232 = vmatprep.subr.mxu0 0.0
      %1233 = vmatpush1.msra.mxu0 0.0
      %1234 = vmatprep.subr.mxu0 0.0
      %1235 = vmatpush1.msra.mxu0 0.0
      %1236 = vmatprep.subr.mxu0 0.0
      %1237 = vmatpush1.msra.mxu0 0.0
      %1238 = vmatprep.subr.mxu0 0.0
      %1239 = vmatpush1.msra.mxu0 0.0
      %1240 = vmatprep.subr.mxu0 0.0
      %1241 = vmatpush1.msra.mxu0 0.0
      %1242 = vmatprep.subr.mxu0 0.0
      %1243 = vmatpush1.msra.mxu0 0.0
      %1244 = vmatprep.subr.mxu0 0.0
      %1245 = vmatpush1.msra.mxu0 0.0
      %1246 = vmatprep.subr.mxu0 0.0
      %1247 = vmatpush1.msra.mxu0 0.0
      %1248 = vmatprep.subr.mxu0 0.0
      %1249 = vmatpush1.msra.mxu0 0.0
      %1250 = vmatprep.subr.mxu0 0.0
      %1251 = vmatpush1.msra.mxu0 0.0
      %1252 = vmatprep.subr.mxu0 0.0
      %1253 = vmatpush1.msra.mxu0 0.0
      %1254 = vmatprep.subr.mxu0 0.0
      %1255 = vmatpush1.msra.mxu0 0.0
      %1256 = vmatprep.subr.mxu0 0.0
      %1257 = vmatpush1.msra.mxu0 0.0
      %1258 = vmatprep.subr.mxu0 0.0
      %1259 = vmatpush1.msra.mxu0 0.0
      %1260 = vmatprep.subr.mxu0 0.0
      %1261 = vmatpush1.msra.mxu0 0.0
      %1262 = vmatprep.subr.mxu0 0.0
      %1263 = vmatpush1.msra.mxu0 0.0
      %1264 = vmatprep.subr.mxu0 0.0
      %1265 = vmatpush1.msra.mxu0 0.0
      %1266 = vmatprep.subr.mxu0 0.0
      %1267 = vmatpush1.msra.mxu0 0.0
      %1268 = vmatprep.subr.mxu0 0.0
      %1269 = vmatpush1.msra.mxu0 0.0
      %1270 = vmatprep.subr.mxu0 0.0
      %1271 = vmatpush1.msra.mxu0 0.0
      %1272 = vmatprep.subr.mxu0 0.0
      %1273 = vmatpush1.msra.mxu0 0.0
      %1274 = vmatprep.subr.mxu0 0.0
      %1275 = vmatpush1.msra.mxu0 0.0
      %1276 = vmatprep.subr.mxu0 0.0
      %1277 = vmatpush1.msra.mxu0 0.0
      %1278 = vmatprep.subr.mxu0 0.0
      %1279 = vmatpush1.msra.mxu0 0.0
      %1280 = vmatprep.subr.mxu0 0.0
      %1281 = vmatpush1.msra.mxu0 0.0
      %1282 = vmatprep.subr.mxu0 0.0
      %1283 = vmatpush1.msra.mxu0 0.0
      %1284 = vmatprep.subr.mxu0 0.0
      %1285 = vmatpush1.msra.mxu0 0.0
      %1286 = vmatprep.subr.mxu0 0.0
      %1287 = vmatpush1.msra.mxu0 0.0
      %1288 = vmatprep.subr.mxu0 0.0
      %1289 = vmatpush1.msra.mxu0 0.0
      %1290 = vmatprep.subr.mxu0 0.0
      %1291 = vmatpush1.msra.mxu0 0.0
      %1292 = vmatprep.mubr.f32.mxu0 0.0
      %v1293 = vand.u32 %v333, 4294901760
      %1294 = vmatmul.mubr.f32.gmra.mrb[0].mxu0 %v1293
      %v1295 = vpop.f32.mrb[0].mxu0
      %v1296 = vadd.f32 %v1083, %v1295
      %v1297 = vpop.f32.mrb[0].mxu0
      %v1298 = vadd.f32 %v1085, %v1297
      %1299 = vmatprep.mubr.f32.mxu0 0.0
      %v1300 = vand.u32 %v336, 4294901760
      %1301 = vmatmul.mubr.f32.gmra.mrb[0].mxu0 %v1300
      %v1302 = vpop.f32.mrb[0].mxu0
      %v1303 = vadd.f32 %v1092, %v1302
      %v1304 = vpop.f32.mrb[0].mxu0
      %v1305 = vadd.f32 %v1094, %v1304
      %1306 = vmatprep.mubr.f32.mxu0 0.0
      %v1307 = vand.u32 %v339, 4294901760
      %1308 = vmatmul.mubr.f32.gmra.mrb[0].mxu0 %v1307
      %v1309 = vpop.f32.mrb[0].mxu0
      %v1310 = vadd.f32 %v1101, %v1309
      %v1311 = vpop.f32.mrb[0].mxu0
      %v1312 = vadd.f32 %v1103, %v1311
      %1313 = vmatprep.mubr.f32.mxu0 0.0
      %v1314 = vand.u32 %v342, 4294901760
      %1315 = vmatmul.mubr.f32.gmra.mrb[0].mxu0 %v1314
      %v1316 = vpop.f32.mrb[0].mxu0
      %v1317 = vadd.f32 %v1110, %v1316
      %v1318 = vpop.f32.mrb[0].mxu0
      %v1319 = vadd.f32 %v1112, %v1318
      %1320 = vmatprep.mubr.f32.mxu0 0.0
      %v1321 = vand.u32 %v345, 4294901760
      %1322 = vmatmul.mubr.f32.gmra.mrb[0].mxu0 %v1321
      %v1323 = vpop.f32.mrb[0].mxu0
      %v1324 = vadd.f32 %v1119, %v1323
      %v1325 = vpop.f32.mrb[0].mxu0
      %v1326 = vadd.f32 %v1121, %v1325
      %1327 = vmatprep.mubr.f32.mxu0 0.0
      %v1328 = vand.u32 %v348, 4294901760
      %1329 = vmatmul.mubr.f32.gmra.mrb[0].mxu0 %v1328
      %v1330 = vpop.f32.mrb[0].mxu0
      %v1331 = vadd.f32 %v1128, %v1330
      %v1332 = vpop.f32.mrb[0].mxu0
      %v1333 = vadd.f32 %v1130, %v1332
      %1334 = vmatprep.mubr.f32.mxu0 0.0
      %v1335 = vand.u32 %v351, 4294901760
      %1336 = vmatmul.mubr.f32.gmra.mrb[0].mxu0 %v1335
      %v1337 = vpop.f32.mrb[0].mxu0
      %v1338 = vadd.f32 %v1137, %v1337
      %v1339 = vpop.f32.mrb[0].mxu0
      %v1340 = vadd.f32 %v1139, %v1339
      %1341 = vmatprep.mubr.f32.mxu0 0.0
      %v1342 = vand.u32 %v354, 4294901760
      %1343 = vmatmul.mubr.f32.gmra.mrb[0].mxu0 %v1342
      %v1344 = vpop.f32.mrb[0].mxu0
      %v1345 = vadd.f32 %v1146, %v1344
      %v1346 = vpop.f32.mrb[0].mxu0
      %v1347 = vadd.f32 %v1148, %v1346
      %1348 = vmatprep.mubr.f32.mxu0 0.0
      %v1349 = vand.u32 %v357, 4294901760
      %1350 = vmatmul.mubr.f32.gmra.mrb[0].mxu0 %v1349
      %v1351 = vpop.f32.mrb[0].mxu0
      %v1352 = vadd.f32 %v1155, %v1351
      %v1353 = vpop.f32.mrb[0].mxu0
      %v1354 = vadd.f32 %v1157, %v1353
      %1355 = vmatprep.mubr.f32.mxu0 0.0
      %v1356 = vand.u32 %v360, 4294901760
      %1357 = vmatmul.mubr.f32.gmra.mrb[0].mxu0 %v1356
      %v1358 = vpop.f32.mrb[0].mxu0
      %v1359 = vadd.f32 %v1164, %v1358
      %v1360 = vpop.f32.mrb[0].mxu0
      %v1361 = vadd.f32 %v1166, %v1360
      %1362 = vmatprep.mubr.f32.mxu0 0.0
      %v1363 = vand.u32 %v363, 4294901760
      %1364 = vmatmul.mubr.f32.gmra.mrb[0].mxu0 %v1363
      %v1365 = vpop.f32.mrb[0].mxu0
      %v1366 = vadd.f32 %v1173, %v1365
      %v1367 = vpop.f32.mrb[0].mxu0
      %v1368 = vadd.f32 %v1175, %v1367
      %1369 = vmatprep.mubr.f32.mxu0 0.0
      %v1370 = vand.u32 %v366, 4294901760
      %1371 = vmatmul.mubr.f32.gmra.mrb[0].mxu0 %v1370
      %v1372 = vpop.f32.mrb[0].mxu0
      %v1373 = vadd.f32 %v1182, %v1372
      %v1374 = vpop.f32.mrb[0].mxu0
      %v1375 = vadd.f32 %v1184, %v1374
      %1376 = vmatprep.mubr.f32.mxu0 0.0
      %v1377 = vand.u32 %v369, 4294901760
      %1378 = vmatmul.mubr.f32.gmra.mrb[0].mxu0 %v1377
      %v1379 = vpop.f32.mrb[0].mxu0
      %v1380 = vadd.f32 %v1191, %v1379
      %v1381 = vpop.f32.mrb[0].mxu0
      %v1382 = vadd.f32 %v1193, %v1381
      %1383 = vmatprep.mubr.f32.mxu0 0.0
      %v1384 = vand.u32 %v372, 4294901760
      %1385 = vmatmul.mubr.f32.gmra.mrb[0].mxu0 %v1384
      %v1386 = vpop.f32.mrb[0].mxu0
      %v1387 = vadd.f32 %v1200, %v1386
      %v1388 = vpop.f32.mrb[0].mxu0
      %v1389 = vadd.f32 %v1202, %v1388
      %1390 = vmatprep.mubr.f32.mxu0 0.0
      %v1391 = vand.u32 %v375, 4294901760
      %1392 = vmatmul.mubr.f32.gmra.mrb[0].mxu0 %v1391
      %v1393 = vpop.f32.mrb[0].mxu0
      %v1394 = vadd.f32 %v1209, %v1393
      %v1395 = vpop.f32.mrb[0].mxu0
      %v1396 = vadd.f32 %v1211, %v1395
      %1397 = vmatprep.mubr.f32.mxu0 0.0
      %v1398 = vand.u32 %v378, 4294901760
      %1399 = vmatmul.mubr.f32.gmra.mrb[0].mxu0 %v1398
      %v1400 = vpop.f32.mrb[0].mxu0
      %v1401 = vadd.f32 %v1218, %v1400
      %v1402 = vpop.f32.mrb[0].mxu0
      %v1403 = vadd.f32 %v1220, %v1402
      %1404 = vdwg.mxu0
      %v1405 = vand.u32 %v382, 4294901760
      %1406 = vmatprep.subr.mxu0 %v1405
      %v1407 = vand.u32 %v380, 4294901760
      %1408 = vmatpush1.msra.mxu0 %v1407
      %1409 = vmatprep.subr.mxu0 0.0
      %1410 = vmatpush1.msra.mxu0 0.0
      %1411 = vmatprep.subr.mxu0 0.0
      %1412 = vmatpush1.msra.mxu0 0.0
      %1413 = vmatprep.subr.mxu0 0.0
      %1414 = vmatpush1.msra.mxu0 0.0
      %1415 = vmatprep.subr.mxu0 0.0
      %1416 = vmatpush1.msra.mxu0 0.0
      %1417 = vmatprep.subr.mxu0 0.0
      %1418 = vmatpush1.msra.mxu0 0.0
      %1419 = vmatprep.subr.mxu0 0.0
      %1420 = vmatpush1.msra.mxu0 0.0
      %1421 = vmatprep.subr.mxu0 0.0
      %1422 = vmatpush1.msra.mxu0 0.0
      %1423 = vmatprep.subr.mxu0 0.0
      %1424 = vmatpush1.msra.mxu0 0.0
      %1425 = vmatprep.subr.mxu0 0.0
      %1426 = vmatpush1.msra.mxu0 0.0
      %1427 = vmatprep.subr.mxu0 0.0
      %1428 = vmatpush1.msra.mxu0 0.0
      %1429 = vmatprep.subr.mxu0 0.0
      %1430 = vmatpush1.msra.mxu0 0.0
      %1431 = vmatprep.subr.mxu0 0.0
      %1432 = vmatpush1.msra.mxu0 0.0
      %1433 = vmatprep.subr.mxu0 0.0
      %1434 = vmatpush1.msra.mxu0 0.0
      %1435 = vmatprep.subr.mxu0 0.0
      %1436 = vmatpush1.msra.mxu0 0.0
      %1437 = vmatprep.subr.mxu0 0.0
      %1438 = vmatpush1.msra.mxu0 0.0
      %1439 = vmatprep.subr.mxu0 0.0
      %1440 = vmatpush1.msra.mxu0 0.0
      %1441 = vmatprep.subr.mxu0 0.0
      %1442 = vmatpush1.msra.mxu0 0.0
      %1443 = vmatprep.subr.mxu0 0.0
      %1444 = vmatpush1.msra.mxu0 0.0
      %1445 = vmatprep.subr.mxu0 0.0
      %1446 = vmatpush1.msra.mxu0 0.0
      %1447 = vmatprep.subr.mxu0 0.0
      %1448 = vmatpush1.msra.mxu0 0.0
      %1449 = vmatprep.subr.mxu0 0.0
      %1450 = vmatpush1.msra.mxu0 0.0
      %1451 = vmatprep.subr.mxu0 0.0
      %1452 = vmatpush1.msra.mxu0 0.0
      %1453 = vmatprep.subr.mxu0 0.0
      %1454 = vmatpush1.msra.mxu0 0.0
      %1455 = vmatprep.subr.mxu0 0.0
      %1456 = vmatpush1.msra.mxu0 0.0
      %1457 = vmatprep.subr.mxu0 0.0
      %1458 = vmatpush1.msra.mxu0 0.0
      %1459 = vmatprep.subr.mxu0 0.0
      %1460 = vmatpush1.msra.mxu0 0.0
      %1461 = vmatprep.subr.mxu0 0.0
      %1462 = vmatpush1.msra.mxu0 0.0
      %1463 = vmatprep.subr.mxu0 0.0
      %1464 = vmatpush1.msra.mxu0 0.0
      %1465 = vmatprep.subr.mxu0 0.0
      %1466 = vmatpush1.msra.mxu0 0.0
      %1467 = vmatprep.subr.mxu0 0.0
      %1468 = vmatpush1.msra.mxu0 0.0
      %1469 = vmatprep.subr.mxu0 0.0
      %1470 = vmatpush1.msra.mxu0 0.0
      %1471 = vmatprep.mubr.f32.mxu0 0.0
      %v1472 = vand.u32 %v333, 4294901760
      %1473 = vmatmul.mubr.f32.gmra.mrb[0].mxu0 %v1472
      %v1474 = vpop.f32.mrb[0].mxu0
      %v1475 = vadd.f32 %v1296, %v1474
      %v1476 = vpop.f32.mrb[0].mxu0
      %v1477 = vadd.f32 %v1298, %v1476
      %1478 = vmatprep.mubr.f32.mxu0 0.0
      %v1479 = vand.u32 %v336, 4294901760
      %1480 = vmatmul.mubr.f32.gmra.mrb[0].mxu0 %v1479
      %v1481 = vpop.f32.mrb[0].mxu0
      %v1482 = vadd.f32 %v1303, %v1481
      %v1483 = vpop.f32.mrb[0].mxu0
      %v1484 = vadd.f32 %v1305, %v1483
      %1485 = vmatprep.mubr.f32.mxu0 0.0
      %v1486 = vand.u32 %v339, 4294901760
      %1487 = vmatmul.mubr.f32.gmra.mrb[0].mxu0 %v1486
      %v1488 = vpop.f32.mrb[0].mxu0
      %v1489 = vadd.f32 %v1310, %v1488
      %v1490 = vpop.f32.mrb[0].mxu0
      %v1491 = vadd.f32 %v1312, %v1490
      %1492 = vmatprep.mubr.f32.mxu0 0.0
      %v1493 = vand.u32 %v342, 4294901760
      %1494 = vmatmul.mubr.f32.gmra.mrb[0].mxu0 %v1493
      %v1495 = vpop.f32.mrb[0].mxu0
      %v1496 = vadd.f32 %v1317, %v1495
      %v1497 = vpop.f32.mrb[0].mxu0
      %v1498 = vadd.f32 %v1319, %v1497
      %1499 = vmatprep.mubr.f32.mxu0 0.0
      %v1500 = vand.u32 %v345, 4294901760
      %1501 = vmatmul.mubr.f32.gmra.mrb[0].mxu0 %v1500
      %v1502 = vpop.f32.mrb[0].mxu0
      %v1503 = vadd.f32 %v1324, %v1502
      %v1504 = vpop.f32.mrb[0].mxu0
      %v1505 = vadd.f32 %v1326, %v1504
      %1506 = vmatprep.mubr.f32.mxu0 0.0
      %v1507 = vand.u32 %v348, 4294901760
      %1508 = vmatmul.mubr.f32.gmra.mrb[0].mxu0 %v1507
      %v1509 = vpop.f32.mrb[0].mxu0
      %v1510 = vadd.f32 %v1331, %v1509
      %v1511 = vpop.f32.mrb[0].mxu0
      %v1512 = vadd.f32 %v1333, %v1511
      %1513 = vmatprep.mubr.f32.mxu0 0.0
      %v1514 = vand.u32 %v351, 4294901760
      %1515 = vmatmul.mubr.f32.gmra.mrb[0].mxu0 %v1514
      %v1516 = vpop.f32.mrb[0].mxu0
      %v1517 = vadd.f32 %v1338, %v1516
      %v1518 = vpop.f32.mrb[0].mxu0
      %v1519 = vadd.f32 %v1340, %v1518
      %1520 = vmatprep.mubr.f32.mxu0 0.0
      %v1521 = vand.u32 %v354, 4294901760
      %1522 = vmatmul.mubr.f32.gmra.mrb[0].mxu0 %v1521
      %v1523 = vpop.f32.mrb[0].mxu0
      %v1524 = vadd.f32 %v1345, %v1523
      %v1525 = vpop.f32.mrb[0].mxu0
      %v1526 = vadd.f32 %v1347, %v1525
      %1527 = vmatprep.mubr.f32.mxu0 0.0
      %v1528 = vand.u32 %v357, 4294901760
      %1529 = vmatmul.mubr.f32.gmra.mrb[0].mxu0 %v1528
      %v1530 = vpop.f32.mrb[0].mxu0
      %v1531 = vadd.f32 %v1352, %v1530
      %v1532 = vpop.f32.mrb[0].mxu0
      %v1533 = vadd.f32 %v1354, %v1532
      %1534 = vmatprep.mubr.f32.mxu0 0.0
      %v1535 = vand.u32 %v360, 4294901760
      %1536 = vmatmul.mubr.f32.gmra.mrb[0].mxu0 %v1535
      %v1537 = vpop.f32.mrb[0].mxu0
      %v1538 = vadd.f32 %v1359, %v1537
      %v1539 = vpop.f32.mrb[0].mxu0
      %v1540 = vadd.f32 %v1361, %v1539
      %1541 = vmatprep.mubr.f32.mxu0 0.0
      %v1542 = vand.u32 %v363, 4294901760
      %1543 = vmatmul.mubr.f32.gmra.mrb[0].mxu0 %v1542
      %v1544 = vpop.f32.mrb[0].mxu0
      %v1545 = vadd.f32 %v1366, %v1544
      %v1546 = vpop.f32.mrb[0].mxu0
      %v1547 = vadd.f32 %v1368, %v1546
      %1548 = vmatprep.mubr.f32.mxu0 0.0
      %v1549 = vand.u32 %v366, 4294901760
      %1550 = vmatmul.mubr.f32.gmra.mrb[0].mxu0 %v1549
      %v1551 = vpop.f32.mrb[0].mxu0
      %v1552 = vadd.f32 %v1373, %v1551
      %v1553 = vpop.f32.mrb[0].mxu0
      %v1554 = vadd.f32 %v1375, %v1553
      %1555 = vmatprep.mubr.f32.mxu0 0.0
      %v1556 = vand.u32 %v369, 4294901760
      %1557 = vmatmul.mubr.f32.gmra.mrb[0].mxu0 %v1556
      %v1558 = vpop.f32.mrb[0].mxu0
      %v1559 = vadd.f32 %v1380, %v1558
      %v1560 = vpop.f32.mrb[0].mxu0
      %v1561 = vadd.f32 %v1382, %v1560
      %1562 = vmatprep.mubr.f32.mxu0 0.0
      %v1563 = vand.u32 %v372, 4294901760
      %1564 = vmatmul.mubr.f32.gmra.mrb[0].mxu0 %v1563
      %v1565 = vpop.f32.mrb[0].mxu0
      %v1566 = vadd.f32 %v1387, %v1565
      %v1567 = vpop.f32.mrb[0].mxu0
      %v1568 = vadd.f32 %v1389, %v1567
      %1569 = vmatprep.mubr.f32.mxu0 0.0
      %v1570 = vand.u32 %v375, 4294901760
      %1571 = vmatmul.mubr.f32.gmra.mrb[0].mxu0 %v1570
      %v1572 = vpop.f32.mrb[0].mxu0
      %v1573 = vadd.f32 %v1394, %v1572
      %v1574 = vpop.f32.mrb[0].mxu0
      %v1575 = vadd.f32 %v1396, %v1574
      %1576 = vmatprep.mubr.f32.mxu0 0.0
      %v1577 = vand.u32 %v378, 4294901760
      %1578 = vmatmul.mubr.f32.gmra.mrb[0].mxu0 %v1577
      %v1579 = vpop.f32.mrb[0].mxu0
      %v1580 = vadd.f32 %v1401, %v1579
      %v1581 = vpop.f32.mrb[0].mxu0
      %v1582 = vadd.f32 %v1403, %v1581
      %1583 = vdwg.mxu0
      %v1584 = vadd.f32 %v1475, %v306
      %v1585 = vadd.f32 %v1477, %v313
      %v1586 = vadd.f32 %v1482, %v306
      %v1587 = vadd.f32 %v1484, %v313
      %v1588 = vadd.f32 %v1489, %v306
      %v1589 = vadd.f32 %v1491, %v313
      %v1590 = vadd.f32 %v1496, %v306
      %v1591 = vadd.f32 %v1498, %v313
      %v1592 = vadd.f32 %v1503, %v306
      %v1593 = vadd.f32 %v1505, %v313
      %v1594 = vadd.f32 %v1510, %v306
      %v1595 = vadd.f32 %v1512, %v313
      %v1596 = vadd.f32 %v1517, %v306
      %v1597 = vadd.f32 %v1519, %v313
      %v1598 = vadd.f32 %v1524, %v306
      %v1599 = vadd.f32 %v1526, %v313
      %v1600 = vadd.f32 %v1531, %v306
      %v1601 = vadd.f32 %v1533, %v313
      %v1602 = vadd.f32 %v1538, %v306
      %v1603 = vadd.f32 %v1540, %v313
      %v1604 = vadd.f32 %v1545, %v306
      %v1605 = vadd.f32 %v1547, %v313
      %v1606 = vadd.f32 %v1552, %v306
      %v1607 = vadd.f32 %v1554, %v313
      %v1608 = vadd.f32 %v1559, %v306
      %v1609 = vadd.f32 %v1561, %v313
      %v1610 = vadd.f32 %v1566, %v306
      %v1611 = vadd.f32 %v1568, %v313
      %v1612 = vadd.f32 %v1573, %v306
      %v1613 = vadd.f32 %v1575, %v313
      %v1614 = vadd.f32 %v1580, %v306
      %v1615 = vadd.f32 %v1582, %v313
      %v1616 = vmax.f32 %v1584, 0.0
      %v1617 = vmax.f32 %v1585, 0.0
      %v1618 = vmax.f32 %v1586, 0.0
      %v1619 = vmax.f32 %v1587, 0.0
      %v1620 = vmax.f32 %v1588, 0.0
      %v1621 = vmax.f32 %v1589, 0.0
      %v1622 = vmax.f32 %v1590, 0.0
      %v1623 = vmax.f32 %v1591, 0.0
      %v1624 = vmax.f32 %v1592, 0.0
      %v1625 = vmax.f32 %v1593, 0.0
      %v1626 = vmax.f32 %v1594, 0.0
      %v1627 = vmax.f32 %v1595, 0.0
      %v1628 = vmax.f32 %v1596, 0.0
      %v1629 = vmax.f32 %v1597, 0.0
      %v1630 = vmax.f32 %v1598, 0.0
      %v1631 = vmax.f32 %v1599, 0.0
      %v1632 = vmax.f32 %v1600, 0.0
      %v1633 = vmax.f32 %v1601, 0.0
      %v1634 = vmax.f32 %v1602, 0.0
      %v1635 = vmax.f32 %v1603, 0.0
      %v1636 = vmax.f32 %v1604, 0.0
      %v1637 = vmax.f32 %v1605, 0.0
      %v1638 = vmax.f32 %v1606, 0.0
      %v1639 = vmax.f32 %v1607, 0.0
      %v1640 = vmax.f32 %v1608, 0.0
      %v1641 = vmax.f32 %v1609, 0.0
      %v1642 = vmax.f32 %v1610, 0.0
      %v1643 = vmax.f32 %v1611, 0.0
      %v1644 = vmax.f32 %v1612, 0.0
      %v1645 = vmax.f32 %v1613, 0.0
      %v1646 = vmax.f32 %v1614, 0.0
      %v1647 = vmax.f32 %v1615, 0.0
      %v1648 = vmin.f32 %v1616, %v1620
      %v1649 = vmin.f32 %v1618, %v1622
      %v1650 = vmin.f32 %v1648, %v1624
      %v1651 = vmin.f32 %v1649, %v1626
      %v1652 = vmin.f32 %v1650, %v1628
      %v1653 = vmin.f32 %v1651, %v1630
      %v1654 = vmin.f32 %v1652, %v1632
      %v1655 = vmin.f32 %v1653, %v1634
      %v1656 = vmin.f32 %v1654, %v1636
      %v1657 = vmin.f32 %v1655, %v1638
      %v1658 = vmin.f32 %v1656, %v1640
      %v1659 = vmin.f32 %v1657, %v1642
      %v1660 = vmin.f32 %v1658, %v1644
      %v1661 = vmin.f32 %v1659, %v1646
      %v1662 = vmin.f32 %v1660, %v1661
      %v1663 = vrot.slane %v1662, 4
      %v1664 = vmin.f32 %v1662, %v1663
      %v1665 = vrot.slane %v1664, 2
      %v1666 = vmin.f32 %v1664, %v1665
      %v1667 = vrot.slane %v1666, 1
      %v1668 = vmin.f32 %v1666, %v1667
      %v1669 = vmin.f32 %v1617, %v1621
      %v1670 = vmin.f32 %v1619, %v1623
      %v1671 = vmin.f32 %v1669, %v1625
      %v1672 = vmin.f32 %v1670, %v1627
      %v1673 = vmin.f32 %v1671, %v1629
      %v1674 = vmin.f32 %v1672, %v1631
      %v1675 = vmin.f32 %v1673, %v1633
      %v1676 = vmin.f32 %v1674, %v1635
      %v1677 = vmin.f32 %v1675, %v1637
      %v1678 = vmin.f32 %v1676, %v1639
      %v1679 = vmin.f32 %v1677, %v1641
      %v1680 = vmin.f32 %v1678, %v1643
      %v1681 = vmin.f32 %v1679, %v1645
      %v1682 = vmin.f32 %v1680, %v1647
      %v1683 = vmin.f32 %v1681, %v1682
      %v1684 = vrot.slane %v1683, 4
      %v1685 = vmin.f32 %v1683, %v1684
      %v1686 = vrot.slane %v1685, 2
      %v1687 = vmin.f32 %v1685, %v1686
      %v1688 = vrot.slane %v1687, 1
      %v1689 = vmin.f32 %v1687, %v1688
      %v1690 = vld [vmem:[#allocation2] sm:$0xff]
      %v1691 = vld [vmem:[#allocation2 + $0x8] sm:$0xff]
      %v1692 = vld [vmem:[#allocation2 + $0x10] sm:$0xff]
      %v1693 = vld [vmem:[#allocation2 + $0x18] sm:$0xff]
      %v1694 = vld [vmem:[#allocation2 + $0x20] sm:$0xff]
      %v1695 = vld [vmem:[#allocation2 + $0x28] sm:$0xff]
      %v1696 = vld [vmem:[#allocation2 + $0x30] sm:$0xff]
      %v1697 = vld [vmem:[#allocation2 + $0x38] sm:$0xff]
      %v1698 = vld [vmem:[#allocation2 + $0x40] sm:$0xff]
      %v1699 = vld [vmem:[#allocation2 + $0x48] sm:$0xff]
      %v1700 = vld [vmem:[#allocation2 + $0x50] sm:$0xff]
      %v1701 = vld [vmem:[#allocation2 + $0x58] sm:$0xff]
      %v1702 = vld [vmem:[#allocation2 + $0x60] sm:$0xff]
      %v1703 = vld [vmem:[#allocation2 + $0x68] sm:$0xff]
      %v1704 = vld [vmem:[#allocation2 + $0x70] sm:$0xff]
      %v1705 = vld [vmem:[#allocation2 + $0x78] sm:$0xff]
      %v1706 = vmin.f32 %v1616, %v1617
      %1707 = vmin.xlane.f32.xlu0 %v1706
      %v1708 = vpop.xlane.xlu0 %1707
      %v1709 = vmin.f32 %v1618, %v1619
      %1710 = vmin.xlane.f32.xlu0 %v1709
      %v1711 = vpop.xlane.xlu0 %1710
      %v1712 = vmin.f32 %v1620, %v1621
      %1713 = vmin.xlane.f32.xlu0 %v1712
      %v1714 = vpop.xlane.xlu0 %1713
      %v1715 = vmin.f32 %v1622, %v1623
      %1716 = vmin.xlane.f32.xlu0 %v1715
      %v1717 = vpop.xlane.xlu0 %1716
      %v1718 = vmin.f32 %v1624, %v1625
      %1719 = vmin.xlane.f32.xlu0 %v1718
      %v1720 = vpop.xlane.xlu0 %1719
      %v1721 = vmin.f32 %v1626, %v1627
      %1722 = vmin.xlane.f32.xlu0 %v1721
      %v1723 = vpop.xlane.xlu0 %1722
      %v1724 = vmin.f32 %v1628, %v1629
      %1725 = vmin.xlane.f32.xlu0 %v1724
      %v1726 = vpop.xlane.xlu0 %1725
      %v1727 = vmin.f32 %v1630, %v1631
      %1728 = vmin.xlane.f32.xlu0 %v1727
      %v1729 = vpop.xlane.xlu0 %1728
      %v1730 = vmin.f32 %v1632, %v1633
      %1731 = vmin.xlane.f32.xlu0 %v1730
      %v1732 = vpop.xlane.xlu0 %1731
      %v1733 = vmin.f32 %v1634, %v1635
      %1734 = vmin.xlane.f32.xlu0 %v1733
      %v1735 = vpop.xlane.xlu0 %1734
      %v1736 = vmin.f32 %v1636, %v1637
      %1737 = vmin.xlane.f32.xlu0 %v1736
      %v1738 = vpop.xlane.xlu0 %1737
      %v1739 = vmin.f32 %v1638, %v1639
      %1740 = vmin.xlane.f32.xlu0 %v1739
      %v1741 = vpop.xlane.xlu0 %1740
      %v1742 = vmin.f32 %v1640, %v1641
      %1743 = vmin.xlane.f32.xlu0 %v1742
      %v1744 = vpop.xlane.xlu0 %1743
      %v1745 = vmin.f32 %v1642, %v1643
      %1746 = vmin.xlane.f32.xlu0 %v1745
      %v1747 = vpop.xlane.xlu0 %1746
      %v1748 = vmin.f32 %v1644, %v1645
      %1749 = vmin.xlane.f32.xlu0 %v1748
      %v1750 = vpop.xlane.xlu0 %1749
      %v1751 = vmin.f32 %v1646, %v1647
      %1752 = vmin.xlane.f32.xlu0 %v1751
      %v1753 = vpop.xlane.xlu0 %1752
      %v1754 = vmin.f32 %v1690, %v1708
      %v1755 = vmin.f32 %v1691, %v1711
      %v1756 = vmin.f32 %v1692, %v1714
      %v1757 = vmin.f32 %v1693, %v1717
      %v1758 = vmin.f32 %v1694, %v1720
      %v1759 = vmin.f32 %v1695, %v1723
      %v1760 = vmin.f32 %v1696, %v1726
      %v1761 = vmin.f32 %v1697, %v1729
      %v1762 = vmin.f32 %v1698, %v1732
      %v1763 = vmin.f32 %v1699, %v1735
      %v1764 = vmin.f32 %v1700, %v1738
      %v1765 = vmin.f32 %v1701, %v1741
      %v1766 = vmin.f32 %v1702, %v1744
      %v1767 = vmin.f32 %v1703, %v1747
      %v1768 = vmin.f32 %v1704, %v1750
      %v1769 = vmin.f32 %v1705, %v1753
      %vm1770 = vcmask 7168
      %1771 = vst.msk [vmem:[#allocation2] sm:$0xff] %vm1770, %v1754
      %1772 = vst.msk [vmem:[#allocation2 + $0x8] sm:$0xff] %vm1770, %v1755
      %1773 = vst.msk [vmem:[#allocation2 + $0x10] sm:$0xff] %vm1770, %v1756
      %1774 = vst.msk [vmem:[#allocation2 + $0x18] sm:$0xff] %vm1770, %v1757
      %1775 = vst.msk [vmem:[#allocation2 + $0x20] sm:$0xff] %vm1770, %v1758
      %1776 = vst.msk [vmem:[#allocation2 + $0x28] sm:$0xff] %vm1770, %v1759
      %1777 = vst.msk [vmem:[#allocation2 + $0x30] sm:$0xff] %vm1770, %v1760
      %1778 = vst.msk [vmem:[#allocation2 + $0x38] sm:$0xff] %vm1770, %v1761
      %1779 = vst.msk [vmem:[#allocation2 + $0x40] sm:$0xff] %vm1770, %v1762
      %1780 = vst.msk [vmem:[#allocation2 + $0x48] sm:$0xff] %vm1770, %v1763
      %1781 = vst.msk [vmem:[#allocation2 + $0x50] sm:$0xff] %vm1770, %v1764
      %1782 = vst.msk [vmem:[#allocation2 + $0x58] sm:$0xff] %vm1770, %v1765
      %1783 = vst.msk [vmem:[#allocation2 + $0x60] sm:$0xff] %vm1770, %v1766
      %1784 = vst.msk [vmem:[#allocation2 + $0x68] sm:$0xff] %vm1770, %v1767
      %1785 = vst.msk [vmem:[#allocation2 + $0x70] sm:$0xff] %vm1770, %v1768
      %1786 = vst.msk [vmem:[#allocation2 + $0x78] sm:$0xff] %vm1770, %v1769
      %v1787 = vld [vmem:[#allocation3] sm:$0x1]
      %v1788 = vadd.f32 %v1668, %v1689
      %1789 = vadd.xlane.f32.xlu0 %v1788
      %v1790 = vpop.xlane.xlu0 %1789
      %v1791 = vadd.f32 %v1787, %v1790
      %vm1792 = vcmask 0
      %1793 = vst.msk [vmem:[#allocation3] sm:$0x1] %vm1792, %v1791
      // Predicated region
      $region33: #{chamfer_distance_loss.1} parent=27 // pred_check
        %p1794 = pneg %p190
      $region34: #{chamfer_distance_loss.1} parent=27 // pred_check_branch
        %1796 = sbr.rel (%p1794) target = $region36
      $region35: #{chamfer_distance_loss.1} parent=27 // pred_region
        %v1797 = vld [vmem:[#allocation2] sm:$0xff]
        %v1798 = vld [vmem:[#allocation2 + $0x8] sm:$0xff]
        %v1799 = vld [vmem:[#allocation2 + $0x10] sm:$0xff]
        %v1800 = vld [vmem:[#allocation2 + $0x18] sm:$0xff]
        %v1801 = vld [vmem:[#allocation2 + $0x20] sm:$0xff]
        %v1802 = vld [vmem:[#allocation2 + $0x28] sm:$0xff]
        %v1803 = vld [vmem:[#allocation2 + $0x30] sm:$0xff]
        %v1804 = vld [vmem:[#allocation2 + $0x38] sm:$0xff]
        %v1805 = vld [vmem:[#allocation2 + $0x40] sm:$0xff]
        %v1806 = vld [vmem:[#allocation2 + $0x48] sm:$0xff]
        %v1807 = vld [vmem:[#allocation2 + $0x50] sm:$0xff]
        %v1808 = vld [vmem:[#allocation2 + $0x58] sm:$0xff]
        %v1809 = vld [vmem:[#allocation2 + $0x60] sm:$0xff]
        %v1810 = vld [vmem:[#allocation2 + $0x68] sm:$0xff]
        %v1811 = vld [vmem:[#allocation2 + $0x70] sm:$0xff]
        %v1812 = vld [vmem:[#allocation2 + $0x78] sm:$0xff]
        %v1813 = vsel %vm1770, %v1797, 0.0
        %v1814 = vsel %vm1770, %v1798, 0.0
        %v1815 = vadd.f32 %v1813, %v1814
        %v1816 = vsel %vm1770, %v1799, 0.0
        %v1817 = vadd.f32 %v1815, %v1816
        %v1818 = vsel %vm1770, %v1800, 0.0
        %v1819 = vadd.f32 %v1817, %v1818
        %v1820 = vsel %vm1770, %v1801, 0.0
        %v1821 = vadd.f32 %v1819, %v1820
        %v1822 = vsel %vm1770, %v1802, 0.0
        %v1823 = vadd.f32 %v1821, %v1822
        %v1824 = vsel %vm1770, %v1803, 0.0
        %v1825 = vadd.f32 %v1823, %v1824
        %v1826 = vsel %vm1770, %v1804, 0.0
        %v1827 = vadd.f32 %v1825, %v1826
        %v1828 = vsel %vm1770, %v1805, 0.0
        %v1829 = vadd.f32 %v1827, %v1828
        %v1830 = vsel %vm1770, %v1806, 0.0
        %v1831 = vadd.f32 %v1829, %v1830
        %v1832 = vsel %vm1770, %v1807, 0.0
        %v1833 = vadd.f32 %v1831, %v1832
        %v1834 = vsel %vm1770, %v1808, 0.0
        %v1835 = vadd.f32 %v1833, %v1834
        %v1836 = vsel %vm1770, %v1809, 0.0
        %v1837 = vadd.f32 %v1835, %v1836
        %v1838 = vsel %vm1770, %v1810, 0.0
        %v1839 = vadd.f32 %v1837, %v1838
        %v1840 = vsel %vm1770, %v1811, 0.0
        %v1841 = vadd.f32 %v1839, %v1840
        %v1842 = vsel %vm1770, %v1812, 0.0
        %v1843 = vadd.f32 %v1841, %v1842
        %1844 = vadd.xlane.f32.xlu0 %v1843
        %v1845 = vpop.xlane.xlu0 %1844
        %v1846 = vrot.slane %v1845, 4
        %v1847 = vadd.f32 %v1845, %v1846
        %v1848 = vrot.slane %v1847, 2
        %v1849 = vadd.f32 %v1847, %v1848
        %v1850 = vrot.slane %v1849, 1
        %v1851 = vadd.f32 %v1849, %v1850
        %s1852 = vtos %v1851
        %s1853 = smul.f32 %s1852, 0.0078125
        %v1854 = vld [vmem:[#allocation3] sm:$0x1]
        %v1855 = vadd.f32 %v1854, 0.0
        %s1856 = vtos %v1855
        %s1857 = smul.f32 %s1856, 0.00390625
        %v1858 = vlaneseq
        %v1859 = vshrl.u32 %v1858, 7
        %vm1860 = vcmp.eq.s32.totalorder %v1859, 0
        %v1861 = vstv %s1853
        %v1862 = vstv %s1857
        %v1863 = vsel %vm1860, %v1861, %v1862
        %1864 = vst [vmem:[%s189] sm:$0x3] %v1863
      $region36: #{chamfer_distance_loss.1} parent=27 // pred_fallthru
        _
      %p1865 = scmp.lt.s32.totalorder %s17, 1
      %s1866 = scalar_select %p1865, %s17, 1
      %s1867 = smul.addr %s1866, 2
      %s1868 = scalar_lea.vmem %s2, %s1867
      // Predicated region
      $region37: #{chamfer_distance_loss.1} parent=27 // pred_check
        %p1869 = pneg %p97
      $region38: #{chamfer_distance_loss.1} parent=27 // pred_check_branch
        %1871 = sbr.rel (%p1869) target = $region40
      $region39: #{chamfer_distance_loss.1} parent=27 // pred_region
        _
      $region40: #{chamfer_distance_loss.1} parent=27 // pred_fallthru
        _
    $region28: #{chamfer_distance_loss.1} parent=5 // pred_fallthru
      _
    %p1872 = scmp.le.s32.totalorder 2, %s8
    // Predicated region
    $region41: #{chamfer_distance_loss.1} parent=5 // pred_check
      %p1873 = pneg %p1872
    $region42: #{chamfer_distance_loss.1} parent=5 // pred_check_branch
      %1875 = sbr.rel (%p1873) target = $region44
    $region43: #{chamfer_distance_loss.1} parent=5 // pred_region
      %s1876 = ssub.s32 %s8, 2
      // Predicated region
      $region45: #{chamfer_distance_loss.1} parent=43 // pred_check
        %p1877 = pneg %p103
      $region46: #{chamfer_distance_loss.1} parent=43 // pred_check_branch
        %1879 = sbr.rel (%p1877) target = $region48
      $region47: #{chamfer_distance_loss.1} parent=43 // pred_region
        %p1880 = scmp.lt.s32.totalorder %s19, 1
        %s1881 = scalar_select %p1880, %s19, 1
        %s1882 = smul.addr %s1881, 2
        %s1883 = scalar_lea.vmem %s2, %s1882
      $region48: #{chamfer_distance_loss.1} parent=43 // pred_fallthru
        _
    $region44: #{chamfer_distance_loss.1} parent=5 // pred_fallthru
      _
  $region6: #{chamfer_distance_loss.1} parent=0 // loop_footer
    %s12 = sadd.s32 1, %s8
  $region7: #{chamfer_distance_loss.1} parent=0 // loop_footer_branch
    %7 = sbr.rel target = $region3
  $region8: #{chamfer_distance_loss.1} parent=0 // loop_exit
    _

</llo_original>
